<compile_context>
chip_gen: v6e
topology: v6e:2x2x1
jax: 0.10.0
libtpu: 0.0.40
codegen_flags: <defaults>
</compile_context>

<pallas_src>
import jax
import jax.numpy as jnp
from jax.experimental import pallas as pl
from jax.experimental.pallas import tpu as pltpu

HEAD_PAD = 128      # lane-dense width for the fused (xyz | wpqr) head
XY_COLS = 3
WPQR_COLS = 4
NORM_EPS = 1e-12    # F.normalize eps


def regression_kernel(x_ref, w1_ref, b1_ref, wh_ref, bh_ref, out_ref, acc_ref):
    """Grid = (B tiles, K tiles).  K (reduction over input_cls) is last/arbitrary."""
    k = pl.program_id(1)

    # ---- pose FC accumulation over K tiles (bf16 MXU, f32 accumulator) -----
    @pl.when(k == 0)
    def _():
        acc_ref[...] = jnp.zeros_like(acc_ref)

    acc_ref[...] += jnp.dot(x_ref[...], w1_ref[...],
                            preferred_element_type=jnp.float32)

    # ---- epilogue on the last K step ---------------------------------------
    @pl.when(k == pl.num_programs(1) - 1)
    def _():
        h = jnp.maximum(acc_ref[...] + b1_ref[...], 0.0)
        # TODO(synk): nn.Dropout(p=0.5) is identity in eval mode; training-mode
        # stochastic masking (pltpu.prng_*) + custom VJP intentionally omitted.

        # Fused heads: cols 0-2 = xyz, cols 3-6 = wpqr, cols 7..127 zero-padded.
        head = jnp.dot(h.astype(jnp.bfloat16), wh_ref[...],
                       preferred_element_type=jnp.float32) + bh_ref[...]

        # L2-normalize the wpqr lanes. Pad lanes (>=7) are exactly zero (zero
        # weight columns + zero bias), so a single `lane >= 3` mask suffices:
        # they contribute nothing to sumsq and stay zero after scaling.
        lane = jax.lax.broadcasted_iota(jnp.int32, head.shape, 1)
        wpqr_mask = lane >= XY_COLS
        sumsq = jnp.sum(jnp.where(wpqr_mask, head * head, 0.0),
                        axis=1, keepdims=True)
        # F.normalize: x / max(||x||, eps)  ==  x * rsqrt(max(||x||^2, eps^2))
        inv_norm = jax.lax.rsqrt(jnp.maximum(sumsq, NORM_EPS * NORM_EPS))
        out_ref[...] = jnp.where(wpqr_mask, head * inv_norm, head)


def _round_up(v, m):
    return (v + m - 1) // m * m


def _pick_tk(input_cls):
    # Largest K tile that divides input_cls (keeps index math exact, no K pad).
    for cand in (512, 256, 128):
        if input_cls % cand == 0:
            return cand
    return input_cls          # full-extent block (single K step)


def _pick_tb(batch):
    return 128 if batch >= 128 else _round_up(batch, 8)


def _vmem_limit_bytes(tb, tk, mid_cls):
    # Double-buffered input/output tiles + resident f32 accumulator, with 2x
    # headroom for Mosaic internal scratch. Capped at 48 MiB for v7x (64 MiB
    # physical VMEM per TC).
    x_tile = tb * tk * 2
    w1_tile = tk * mid_cls * 2
    b1 = mid_cls * 4
    wh = mid_cls * HEAD_PAD * 2
    bh = HEAD_PAD * 4
    out_tile = tb * HEAD_PAD * 4
    acc = tb * mid_cls * 4
    footprint = 2 * (x_tile + w1_tile + b1 + wh + bh + out_tile) + acc
    return int(min(48 << 20, max(4 << 20, 2 * footprint)))


def regression_forward(x, params):
    """x: [B, input_cls] float (any float dtype). Returns (xy [B,3], wpqr [B,4]) f32."""
    B, input_cls = x.shape
    mid_cls = params["w_pose"].shape[1]
    assert params["w_pose"].shape[0] == input_cls

    # Cast activations to bf16 once here (halves x DMA bytes) and pad the batch
    # to a sublane multiple so no masked sublane loads/stores are emitted.
    tb = _pick_tb(B)
    tk = _pick_tk(input_cls)
    padded_b = _round_up(B, tb)
    x_bf16 = x.astype(jnp.bfloat16)
    if padded_b != B:
        x_bf16 = jnp.pad(x_bf16, ((0, padded_b - B), (0, 0)))

    grid = (padded_b // tb, input_cls // tk)

    operands = (x_bf16, params["w_pose"], params["b_pose"],
                params["w_head"], params["b_head"])
    bytes_in = sum(int(a.size) * a.dtype.itemsize for a in operands)
    bytes_out = padded_b * HEAD_PAD * 4
    cost = pl.CostEstimate(
        flops=2 * padded_b * input_cls * mid_cls
              + 2 * padded_b * mid_cls * HEAD_PAD,
        transcendentals=padded_b,                 # one rsqrt per row
        bytes_accessed=bytes_in + bytes_out,
    )

    # TODO(synk): at small batch the kernel is weight-DMA bound; hide the
    # static w_pose/w_head fetch behind the backbone via a cross-call prefetch
    # (pattern P10: preceding pallas_call returning (SEMAPHORE, VMEM) refs).
    # TODO(synk): optional int8 (v5e/v6e) / fp8 e4m3 (v7x) weight quantization
    # with per-channel dequant scales would halve the dominant weight traffic;
    # needs a pose-accuracy check before enabling.

    grid_spec = pltpu.PrefetchScalarGridSpec(
        num_scalar_prefetch=0,
        grid=grid,
        in_specs=[
            pl.BlockSpec((tb, tk), lambda b, k: (b, k)),          # x tile
            pl.BlockSpec((tk, mid_cls), lambda b, k: (k, 0)),     # w_pose tile
            pl.BlockSpec((1, mid_cls), lambda b, k: (0, 0)),      # b_pose
            pl.BlockSpec((mid_cls, HEAD_PAD), lambda b, k: (0, 0)),  # w_head
            pl.BlockSpec((1, HEAD_PAD), lambda b, k: (0, 0)),     # b_head
        ],
        out_specs=pl.BlockSpec((tb, HEAD_PAD), lambda b, k: (b, 0)),
        scratch_shapes=[pltpu.VMEM((tb, mid_cls), jnp.float32)],  # pose-FC acc
    )

    out = pl.pallas_call(
        regression_kernel,
        out_shape=jax.ShapeDtypeStruct((padded_b, HEAD_PAD), jnp.float32),
        grid_spec=grid_spec,
        compiler_params=pltpu.CompilerParams(
            dimension_semantics=("parallel", "arbitrary"),
            vmem_limit_bytes=_vmem_limit_bytes(tb, tk, mid_cls),
        ),
        cost_estimate=cost,
    )(*operands)

    # Lane-dense kernel output; the tiny slices are free layout plumbing here.
    return out[:B, :XY_COLS], out[:B, XY_COLS:XY_COLS + WPQR_COLS]


def init_params(key, input_cls, mid_cls):
    """Deterministic init matching weight_init_resnet (weights=None branch):
       'pose'/'WPQR' weight ~ N(0, 0.01), 'XYZ' weight ~ N(0, 0.5), biases 0.
       Weights stored [in, out] (transposed vs torch) and cast to bf16."""
    k1, k2, k3 = jax.random.split(key, 3)

    w_pose = (0.01 * jax.random.normal(k1, (input_cls, mid_cls), jnp.float32)
              ).astype(jnp.bfloat16)
    b_pose = jnp.zeros((1, mid_cls), jnp.float32)

    w_xyz = 0.5 * jax.random.normal(k2, (mid_cls, XY_COLS), jnp.float32)
    w_wpqr = 0.01 * jax.random.normal(k3, (mid_cls, WPQR_COLS), jnp.float32)

    # Fused head weight: cols 0-2 = xyz, cols 3-6 = wpqr, rest zero.
    w_head = jnp.zeros((mid_cls, HEAD_PAD), jnp.float32)
    w_head = w_head.at[:, :XY_COLS].set(w_xyz)
    w_head = w_head.at[:, XY_COLS:XY_COLS + WPQR_COLS].set(w_wpqr)
    w_head = w_head.astype(jnp.bfloat16)
    b_head = jnp.zeros((1, HEAD_PAD), jnp.float32)

    return {"w_pose": w_pose, "b_pose": b_pose,
            "w_head": w_head, "b_head": b_head}


if __name__ == "__main__":
    # Small shapes consistent with the module (input_cls=512, mid_cls=1024
    # production defaults, scaled). INPUT_CLS=1024 -> tk=512 -> 2 K steps, so
    # the accumulator grid path is exercised; B=6 exercises sublane padding.
    B, INPUT_CLS, MID_CLS = 6, 1024, 512

    key = jax.random.PRNGKey(0)
    kx, kp = jax.random.split(key)
    x = jax.random.normal(kx, (B, INPUT_CLS), jnp.float32)
    params = init_params(kp, INPUT_CLS, MID_CLS)

    out_xy, out_wpqr = regression_forward(x, params)
    jax.block_until_ready((out_xy, out_wpqr))

    # Sanity: shapes, unit-norm quaternion output, and agreement with a pure
    # JAX reference of the same (bf16-weight) computation.
    assert out_xy.shape == (B, XY_COLS) and out_wpqr.shape == (B, WPQR_COLS)
    norms = jnp.linalg.norm(out_wpqr, axis=1)
    assert bool(jnp.all(jnp.abs(norms - 1.0) < 1e-4))

    h_ref = jnp.maximum(
        jnp.dot(x.astype(jnp.bfloat16), params["w_pose"],
                preferred_element_type=jnp.float32) + params["b_pose"], 0.0)
    head_ref = jnp.dot(h_ref.astype(jnp.bfloat16), params["w_head"],
                       preferred_element_type=jnp.float32) + params["b_head"]
    xy_ref = head_ref[:, :XY_COLS]
    wpqr_raw = head_ref[:, XY_COLS:XY_COLS + WPQR_COLS]
    wpqr_ref = wpqr_raw / jnp.maximum(
        jnp.linalg.norm(wpqr_raw, axis=1, keepdims=True), NORM_EPS)
    assert bool(jnp.max(jnp.abs(out_xy - xy_ref)) < 1e-3)
    assert bool(jnp.max(jnp.abs(out_wpqr - wpqr_ref)) < 1e-3)

    print("KERNEL_OK")
</pallas_src>

<mosaic_0001>
module attributes {stable_mosaic.version = 11 : i64} {
  func.func @regression_kernel(%arg0: i32, %arg1: i32, %arg2: memref<8x512xbf16, #tpu.memory_space<vmem>>, %arg3: memref<512x512xbf16, #tpu.memory_space<vmem>>, %arg4: memref<1x512xf32, #tpu.memory_space<vmem>>, %arg5: memref<512x128xbf16, #tpu.memory_space<vmem>>, %arg6: memref<1x128xf32, #tpu.memory_space<vmem>>, %arg7: memref<8x128xf32, #tpu.memory_space<vmem>>, %arg8: memref<8x512xf32, #tpu.memory_space<vmem>>) attributes {dimension_semantics = [#tpu.dimension_semantics<parallel>, #tpu.dimension_semantics<arbitrary>], iteration_bounds = array<i64: 1, 2>, scalar_prefetch = 0 : i64, scratch_operands = 1 : i64, tpu.core_type = #tpu.core_type<tc>, window_params = [{transform_indices = @transform_0, window_bounds = array<i64: 8, 512>}, {transform_indices = @transform_1, window_bounds = array<i64: 512, 512>}, {pipeline_mode = #tpu.pipeline_mode<synchronous>, transform_indices = @transform_2, window_bounds = array<i64: 1, 512>}, {pipeline_mode = #tpu.pipeline_mode<synchronous>, transform_indices = @transform_3, window_bounds = array<i64: 512, 128>}, {pipeline_mode = #tpu.pipeline_mode<synchronous>, transform_indices = @transform_4, window_bounds = array<i64: 1, 128>}, {transform_indices = @transform_5, window_bounds = array<i64: 8, 128>}]} {
    %c0_i32 = arith.constant 0 : i32
    %0 = arith.cmpi eq, %arg1, %c0_i32 : i32
    %1 = arith.extui %0 : i1 to i32
    %c0_i32_0 = arith.constant 0 : i32
    %2 = arith.cmpi ne, %1, %c0_i32_0 : i32
    scf.if %2 {
      %cst_9 = arith.constant 0.000000e+00 : f32
      %12 = vector.broadcast %cst_9 : f32 to vector<8x512xf32>
      %c0_10 = arith.constant 0 : index
      %c0_11 = arith.constant 0 : index
      %13 = vector.load %arg8[%c0_10, %c0_11] : memref<8x512xf32, #tpu.memory_space<vmem>>, vector<8x512xf32>
      tpu.vector_store %arg8[%c0_10, %c0_11], %12 {strides = array<i32>} : memref<8x512xf32, #tpu.memory_space<vmem>>, vector<8x512xf32>,
    } else {
    }
    %c0 = arith.constant 0 : index
    %c0_1 = arith.constant 0 : index
    %3 = vector.load %arg8[%c0, %c0_1] : memref<8x512xf32, #tpu.memory_space<vmem>>, vector<8x512xf32>
    %c0_2 = arith.constant 0 : index
    %c0_3 = arith.constant 0 : index
    %4 = vector.load %arg2[%c0_2, %c0_3] : memref<8x512xbf16, #tpu.memory_space<vmem>>, vector<8x512xbf16>
    %c0_4 = arith.constant 0 : index
    %c0_5 = arith.constant 0 : index
    %5 = vector.load %arg3[%c0_4, %c0_5] : memref<512x512xbf16, #tpu.memory_space<vmem>>, vector<512x512xbf16>
    %cst = arith.constant dense<0.000000e+00> : vector<8x512xf32>
    %6 = tpu.matmul %4, %5, %cst {dimension_numbers = #tpu.dot_dimension_numbers<[1], [0], [0], [1], [0, 0, 1, 1], [], []>} : vector<8x512xbf16>, vector<512x512xbf16>, vector<8x512xf32> -> vector<8x512xf32>
    %7 = arith.addf %3, %6 : vector<8x512xf32>
    %c0_6 = arith.constant 0 : index
    %c0_7 = arith.constant 0 : index
    %8 = vector.load %arg8[%c0_6, %c0_7] : memref<8x512xf32, #tpu.memory_space<vmem>>, vector<8x512xf32>
    tpu.vector_store %arg8[%c0_6, %c0_7], %7 {strides = array<i32>} : memref<8x512xf32, #tpu.memory_space<vmem>>, vector<8x512xf32>,
    %c1_i32 = arith.constant 1 : i32
    %9 = arith.cmpi eq, %arg1, %c1_i32 : i32
    %10 = arith.extui %9 : i1 to i32
    %c0_i32_8 = arith.constant 0 : i32
    %11 = arith.cmpi ne, %10, %c0_i32_8 : i32
    scf.if %11 {
      %c0_9 = arith.constant 0 : index
      %c0_10 = arith.constant 0 : index
      %12 = vector.load %arg8[%c0_9, %c0_10] : memref<8x512xf32, #tpu.memory_space<vmem>>, vector<8x512xf32>
      %c0_11 = arith.constant 0 : index
      %c0_12 = arith.constant 0 : index
      %13 = vector.load %arg4[%c0_11, %c0_12] : memref<1x512xf32, #tpu.memory_space<vmem>>, vector<1x512xf32>
      %14 = vector.broadcast %13 : vector<1x512xf32> to vector<8x512xf32>
      %15 = arith.addf %12, %14 : vector<8x512xf32>
      %cst_13 = arith.constant 0.000000e+00 : f32
      %16 = vector.broadcast %cst_13 : f32 to vector<8x512xf32>
      %17 = arith.maximumf %15, %16 : vector<8x512xf32>
      %18 = arith.truncf %17 : vector<8x512xf32> to vector<8x512xbf16>
      %c0_14 = arith.constant 0 : index
      %c0_15 = arith.constant 0 : index
      %19 = vector.load %arg5[%c0_14, %c0_15] : memref<512x128xbf16, #tpu.memory_space<vmem>>, vector<512x128xbf16>
      %cst_16 = arith.constant dense<0.000000e+00> : vector<8x128xf32>
      %20 = tpu.matmul %18, %19, %cst_16 {dimension_numbers = #tpu.dot_dimension_numbers<[1], [0], [0], [1], [0, 0, 1, 1], [], []>} : vector<8x512xbf16>, vector<512x128xbf16>, vector<8x128xf32> -> vector<8x128xf32>
      %c0_17 = arith.constant 0 : index
      %c0_18 = arith.constant 0 : index
      %21 = vector.load %arg6[%c0_17, %c0_18] : memref<1x128xf32, #tpu.memory_space<vmem>>, vector<1x128xf32>
      %22 = vector.broadcast %21 : vector<1x128xf32> to vector<8x128xf32>
      %23 = arith.addf %20, %22 : vector<8x128xf32>
      %24 = tpu.iota {dimensions = array<i32: 1>} : vector<8x128xi32>
      %c3_i32 = arith.constant 3 : i32
      %25 = vector.broadcast %c3_i32 : i32 to vector<8x128xi32>
      %26 = arith.cmpi sge, %24, %25 : vector<8x128xi32>
      %27 = arith.mulf %23, %23 : vector<8x128xf32>
      %cst_19 = arith.constant 0.000000e+00 : f32
      %28 = vector.broadcast %cst_19 : f32 to vector<8x128xf32>
      %29 = arith.select %26, %27, %28 : vector<8x128xi1>, vector<8x128xf32>
      %cst_20 = arith.constant dense<0.000000e+00> : vector<8xf32>
      %30 = vector.multi_reduction <add>, %29, %cst_20 [1] : vector<8x128xf32> to vector<8xf32>
      %31 = vector.shape_cast %30 : vector<8xf32> to vector<8x1xf32>
      %cst_21 = arith.constant 1.000000e-24 : f32
      %32 = vector.broadcast %cst_21 : f32 to vector<8x1xf32>
      %33 = arith.maximumf %31, %32 : vector<8x1xf32>
      %34 = math.rsqrt %33 : vector<8x1xf32>
      %35 = vector.broadcast %34 : vector<8x1xf32> to vector<8x128xf32>
      %36 = arith.mulf %23, %35 : vector<8x128xf32>
      %37 = arith.select %26, %36, %23 : vector<8x128xi1>, vector<8x128xf32>
      %c0_22 = arith.constant 0 : index
      %c0_23 = arith.constant 0 : index
      %38 = vector.load %arg7[%c0_22, %c0_23] : memref<8x128xf32, #tpu.memory_space<vmem>>, vector<8x128xf32>
      tpu.vector_store %arg7[%c0_22, %c0_23], %37 {strides = array<i32>} : memref<8x128xf32, #tpu.memory_space<vmem>>, vector<8x128xf32>,
    } else {
    }
    return
  }
  func.func @transform_0(%arg0: i32, %arg1: i32) -> (i32, i32) {
    %c0_i32 = arith.constant 0 : i32
    return %arg0, %arg1 : i32, i32
  }
  func.func @transform_1(%arg0: i32, %arg1: i32) -> (i32, i32) {
    %c0_i32 = arith.constant 0 : i32
    %c0_i32_0 = arith.constant 0 : i32
    return %arg1, %c0_i32 : i32, i32
  }
  func.func @transform_2(%arg0: i32, %arg1: i32) -> (i32, i32) {
    %c0_i32 = arith.constant 0 : i32
    %c0_i32_0 = arith.constant 0 : i32
    %c0_i32_1 = arith.constant 0 : i32
    return %c0_i32, %c0_i32_0 : i32, i32
  }
  func.func @transform_3(%arg0: i32, %arg1: i32) -> (i32, i32) {
    %c0_i32 = arith.constant 0 : i32
    %c0_i32_0 = arith.constant 0 : i32
    %c0_i32_1 = arith.constant 0 : i32
    return %c0_i32, %c0_i32_0 : i32, i32
  }
  func.func @transform_4(%arg0: i32, %arg1: i32) -> (i32, i32) {
    %c0_i32 = arith.constant 0 : i32
    %c0_i32_0 = arith.constant 0 : i32
    %c0_i32_1 = arith.constant 0 : i32
    return %c0_i32, %c0_i32_0 : i32, i32
  }
  func.func @transform_5(%arg0: i32, %arg1: i32) -> (i32, i32) {
    %c0_i32 = arith.constant 0 : i32
    %c0_i32_0 = arith.constant 0 : i32
    return %arg0, %c0_i32 : i32, i32
  }
}

</mosaic_0001>

<llo_original>
// kernel: tpu_custom_call.1
$region0: #{tpu_custom_call.1}
  #allocation0 [shape = 'u32[]', space=smem, size = 0x4, offset = 0x4, fixed_abs, tag = 'smem constant byte address 0x4 - core index']
  #allocation1 [shape = 'u32[144,128]{1,0:T(1,128)}', space=vmem, size = 0x12000, scoped, tag = 'internal scratch']
  #allocation2 [shape = 'f32[8,512]{1,0:T(8,128)}', space=vmem, size = 0x4000, scoped, tag = 'scratch operand']
  %s0 = inlined_call_operand.hbm [shape: bf16[8,1024], index: 0, kind: input, shape index: {}]
  %s1 = inlined_call_operand.hbm [shape: bf16[1024,512], index: 1, kind: input, shape index: {}]
  %s2 = inlined_call_operand.hbm [shape: f32[1,512], index: 2, kind: input, shape index: {}]
  %s3 = inlined_call_operand.hbm [shape: bf16[512,128], index: 3, kind: input, shape index: {}]
  %s4 = inlined_call_operand.vmem [shape: f32[1,128], index: 4, kind: input, shape index: {}]
  %s5 = inlined_call_operand.hbm [shape: f32[8,128], index: 5, kind: output, shape index: {}]
  %s6 = sld [smem:[#allocation0]]
  $region77: #{tpu_custom_call.1} parent=0
    _
  %s8 = ssub.s32 1, %s6
  %s9 = scalar_select 0, %s8, %s6
  $region1: #{tpu_custom_call.1} parent=0
    #allocation3 [shape = 'u8[16384]{0}', space=vmem, size = 0x4000, scoped, tag = 'input window, operand 0']
    #allocation4 [shape = 's32[2]{0}', space=sflag, size = 0x8, scoped, tag = 'scoped memory for tpu_custom_call.1']
    #allocation5 [shape = 's32[2]{0}', space=sflag, size = 0x8, scoped, tag = 'scoped memory for tpu_custom_call.1']
    #allocation6 [shape = 'u8[1048576]{0}', space=vmem, size = 0x100000, scoped, tag = 'input window, operand 1']
    #allocation7 [shape = 's32[2]{0}', space=sflag, size = 0x8, scoped, tag = 'scoped memory for tpu_custom_call.1']
    #allocation8 [shape = 'u8[2048]{0}', space=vmem, size = 0x800, scoped, tag = 'input window, operand 2, single buffered']
    #allocation9 [shape = 'u8[131072]{0}', space=vmem, size = 0x20000, scoped, tag = 'input window, operand 3, single buffered']
    #allocation10 [shape = 's32[1]{0}', space=sflag, size = 0x4, scoped, tag = 'scoped memory for tpu_custom_call.1']
    #allocation11 [shape = 'u8[4096]{0}', space=vmem, size = 0x1000, scoped, tag = 'output window, operand 0, single buffered']
    %10 = vsyncpa [#allocation4], 0
    %s11 = scalar_lea.sflag [#allocation4], 1
    %12 = vsyncpa %s11, 0
    %13 = vsyncpa [#allocation7], 0
    %s14 = scalar_lea.sflag [#allocation7], 1
    %15 = vsyncpa %s14, 0
    %16 = vsyncpa [#allocation10], 0
    %17 = vsyncpa [#allocation5], 0
    loop: start=0, step=1, limit=4
    $region2: #{tpu_custom_call.1} parent=1 // loop_pre_header
      _
    $region3: #{tpu_custom_call.1} parent=1 // loop_header
      %s19 = sphi 0, %s23
      %p20 = scmp.ge.s32.totalorder %s19, 4
      %s26 = sphi 0, %s38
      %s27 = sphi 0, %s34
      %s28 = sphi 0, %s26
      %s29 = sphi 0, %s27
      %s30 = sphi 0, %s28
      %s31 = sphi 0, %s29
      %s43 = sphi 0, %s45
      %s46 = sphi 0, %s43
      %s47 = sphi 0, %s46
      %s63 = sphi 0, %s47
      %s69 = sphi 0, %s71
      %s72 = sphi 0, %s69
      %s73 = sphi 0, %s72
      %s89 = sphi 0, %s73
      %s93 = sphi 0, %s93
      %s95 = sphi 0, %s93
      %s96 = sphi 0, %s95
      %s110 = sphi 0, %s96
      %s114 = sphi 0, %s114
      %s116 = sphi 0, %s114
      %s117 = sphi 0, %s116
      %s131 = sphi 0, %s117
      %s135 = sphi 0, %s135
      %s137 = sphi 0, %s135
      %s138 = sphi 0, %s137
      %s152 = sphi 0, %s138
      %s158 = sphi 0, %s160
      %s161 = sphi 0, %s158
      %s162 = sphi 0, %s161
      %s178 = sphi 0, %s162
    $region4: #{tpu_custom_call.1} parent=1 // loop_header_branch
      %22 = sbr.rel (%p20) target = $region8
    $region5: #{tpu_custom_call.1} parent=1 // loop_body
      %s24 = ssub.s32 %s19, 1
      %s25 = ssub.s32 %s19, 2
      %s32 = sadd.s32 1, %s27
      %p33 = scmp.ge.s32.totalorder %s32, 2
      %s34 = scalar_select %p33, 0, %s32
      %s35 = sadd.s32 1, %s26
      %s36 = scalar_select %p33, %s35, %s26
      %p37 = scmp.ge.s32.totalorder %s36, 1
      %s38 = scalar_select %p37, 0, %s36
      %s39 = ssub.s32 %s26, %s38
      %s40 = ssub.s32 %s27, %s34
      %s41 = sor.u32 %s39, %s40
      %p42 = scmp.eq.s32.totalorder %s41, 0
      %s44 = sadd.s32 %s43, 1
      %s45 = scalar_select %p42, %s43, %s44
      %p48 = pneg %p42
      %p49 = scmp.eq.s32.totalorder %s19, 1
      %p50 = por %p48, %p49
      %p51 = scmp.ne.s32.totalorder %s43, %s46
      %p52 = scmp.eq.s32.totalorder %s19, 0
      %p53 = por %p51, %p52
      %p54 = scmp.ne.s32.totalorder %s43, %s46
      %p55 = scmp.eq.s32.totalorder %s24, 1
      %p56 = por %p54, %p55
      %p57 = scmp.ne.s32.totalorder %s46, %s47
      %p58 = scmp.eq.s32.totalorder %s24, 0
      %p59 = por %p57, %p58
      %p60 = scmp.ne.s32.totalorder %s46, %s47
      %p61 = scmp.eq.s32.totalorder %s25, 1
      %p62 = por %p60, %p61
      %p64 = scmp.ne.s32.totalorder %s47, %s63
      %p65 = scmp.eq.s32.totalorder %s25, 0
      %p66 = por %p64, %p65
      %s67 = ssub.s32 %s27, %s34
      %p68 = scmp.eq.s32.totalorder %s67, 0
      %s70 = sadd.s32 %s69, 1
      %s71 = scalar_select %p68, %s69, %s70
      %p74 = pneg %p68
      %p75 = scmp.eq.s32.totalorder %s19, 1
      %p76 = por %p74, %p75
      %p77 = scmp.ne.s32.totalorder %s69, %s72
      %p78 = scmp.eq.s32.totalorder %s19, 0
      %p79 = por %p77, %p78
      %p80 = scmp.ne.s32.totalorder %s69, %s72
      %p81 = scmp.eq.s32.totalorder %s24, 1
      %p82 = por %p80, %p81
      %p83 = scmp.ne.s32.totalorder %s72, %s73
      %p84 = scmp.eq.s32.totalorder %s24, 0
      %p85 = por %p83, %p84
      %p86 = scmp.ne.s32.totalorder %s72, %s73
      %p87 = scmp.eq.s32.totalorder %s25, 1
      %p88 = por %p86, %p87
      %p90 = scmp.ne.s32.totalorder %s73, %s89
      %p91 = scmp.eq.s32.totalorder %s25, 0
      %p92 = por %p90, %p91
      %s94 = sadd.s32 %s93, 1
      %p97 = scmp.eq.s32.totalorder %s19, 1
      %p98 = scmp.ne.s32.totalorder %s93, %s95
      %p99 = scmp.eq.s32.totalorder %s19, 0
      %p100 = por %p98, %p99
      %p101 = scmp.ne.s32.totalorder %s93, %s95
      %p102 = scmp.eq.s32.totalorder %s24, 1
      %p103 = por %p101, %p102
      %p104 = scmp.ne.s32.totalorder %s95, %s96
      %p105 = scmp.eq.s32.totalorder %s24, 0
      %p106 = por %p104, %p105
      %p107 = scmp.ne.s32.totalorder %s95, %s96
      %p108 = scmp.eq.s32.totalorder %s25, 1
      %p109 = por %p107, %p108
      %p111 = scmp.ne.s32.totalorder %s96, %s110
      %p112 = scmp.eq.s32.totalorder %s25, 0
      %p113 = por %p111, %p112
      %s115 = sadd.s32 %s114, 1
      %p118 = scmp.eq.s32.totalorder %s19, 1
      %p119 = scmp.ne.s32.totalorder %s114, %s116
      %p120 = scmp.eq.s32.totalorder %s19, 0
      %p121 = por %p119, %p120
      %p122 = scmp.ne.s32.totalorder %s114, %s116
      %p123 = scmp.eq.s32.totalorder %s24, 1
      %p124 = por %p122, %p123
      %p125 = scmp.ne.s32.totalorder %s116, %s117
      %p126 = scmp.eq.s32.totalorder %s24, 0
      %p127 = por %p125, %p126
      %p128 = scmp.ne.s32.totalorder %s116, %s117
      %p129 = scmp.eq.s32.totalorder %s25, 1
      %p130 = por %p128, %p129
      %p132 = scmp.ne.s32.totalorder %s117, %s131
      %p133 = scmp.eq.s32.totalorder %s25, 0
      %p134 = por %p132, %p133
      %s136 = sadd.s32 %s135, 1
      %p139 = scmp.eq.s32.totalorder %s19, 1
      %p140 = scmp.ne.s32.totalorder %s135, %s137
      %p141 = scmp.eq.s32.totalorder %s19, 0
      %p142 = por %p140, %p141
      %p143 = scmp.ne.s32.totalorder %s135, %s137
      %p144 = scmp.eq.s32.totalorder %s24, 1
      %p145 = por %p143, %p144
      %p146 = scmp.ne.s32.totalorder %s137, %s138
      %p147 = scmp.eq.s32.totalorder %s24, 0
      %p148 = por %p146, %p147
      %p149 = scmp.ne.s32.totalorder %s137, %s138
      %p150 = scmp.eq.s32.totalorder %s25, 1
      %p151 = por %p149, %p150
      %p153 = scmp.ne.s32.totalorder %s138, %s152
      %p154 = scmp.eq.s32.totalorder %s25, 0
      %p155 = por %p153, %p154
      %s156 = ssub.s32 %s26, %s38
      %p157 = scmp.eq.s32.totalorder %s156, 0
      %s159 = sadd.s32 %s158, 1
      %s160 = scalar_select %p157, %s158, %s159
      %p163 = pneg %p157
      %p164 = scmp.eq.s32.totalorder %s19, 1
      %p165 = por %p163, %p164
      %p166 = scmp.ne.s32.totalorder %s158, %s161
      %p167 = scmp.eq.s32.totalorder %s19, 0
      %p168 = por %p166, %p167
      %p169 = scmp.ne.s32.totalorder %s158, %s161
      %p170 = scmp.eq.s32.totalorder %s24, 1
      %p171 = por %p169, %p170
      %p172 = scmp.ne.s32.totalorder %s161, %s162
      %p173 = scmp.eq.s32.totalorder %s24, 0
      %p174 = por %p172, %p173
      %p175 = scmp.ne.s32.totalorder %s161, %s162
      %p176 = scmp.eq.s32.totalorder %s25, 1
      %p177 = por %p175, %p176
      %p179 = scmp.ne.s32.totalorder %s162, %s178
      %p180 = scmp.eq.s32.totalorder %s25, 0
      %p181 = por %p179, %p180
      %p182 = scmp.le.s32.totalorder 1, %s19
      %p183 = scmp.lt.s32.totalorder %s19, 3
      %p184 = pnand %p182, %p183
      %p185 = pneg %p184
      // Predicated region
      $region9: #{tpu_custom_call.1} parent=5 // pred_check
        _
      $region10: #{tpu_custom_call.1} parent=5 // pred_check_branch
        %187 = sbr.rel (%p184) target = $region12
      $region11: #{tpu_custom_call.1} parent=5 // pred_region
        %s188 = ssub.s32 %s19, 1
        // Predicated region
        $region13: #{tpu_custom_call.1} parent=11 // pred_check
          %p189 = pneg %p106
        $region14: #{tpu_custom_call.1} parent=11 // pred_check_branch
          %191 = sbr.rel (%p189) target = $region16
        $region15: #{tpu_custom_call.1} parent=11 // pred_region
          %s193 = ssub.s32 64, 64
          %194 = vsyncadd [#allocation7], %s193
          %s196 = sshll.u32 [#allocation8], 4
          %s197 = int_to_ptr.vmem [resolvable:$true] %s196
          %199 = dma.hbm_to_vmem [thread:$0]  %s2, 64, %s197, [#allocation7]
        $region16: #{tpu_custom_call.1} parent=11 // pred_fallthru
          _
        // Predicated region
        $region17: #{tpu_custom_call.1} parent=11 // pred_check
          %p200 = pneg %p127
        $region18: #{tpu_custom_call.1} parent=11 // pred_check_branch
          %202 = sbr.rel (%p200) target = $region20
        $region19: #{tpu_custom_call.1} parent=11 // pred_region
          %s204 = ssub.s32 4096, 4096
          %205 = vsyncadd [#allocation10], %s204
          %s206 = sshll.u32 [#allocation9], 4
          %s207 = int_to_ptr.vmem [resolvable:$true] %s206
          %212 = dma.hbm_to_vmem [thread:$0]  %s3, 4096, %s207, [#allocation10], 64, 64, 4
        $region20: #{tpu_custom_call.1} parent=11 // pred_fallthru
          _
        // Predicated region
        $region21: #{tpu_custom_call.1} parent=11 // pred_check
          %p213 = pneg %p148
        $region22: #{tpu_custom_call.1} parent=11 // pred_check_branch
          %215 = sbr.rel (%p213) target = $region24
        $region23: #{tpu_custom_call.1} parent=11 // pred_region
          _
        $region24: #{tpu_custom_call.1} parent=11 // pred_fallthru
          _
      $region12: #{tpu_custom_call.1} parent=5 // pred_fallthru
        _
      %p216 = scmp.lt.s32.totalorder %s19, 2
      // Predicated region
      $region25: #{tpu_custom_call.1} parent=5 // pred_check
        %p217 = pneg %p216
      $region26: #{tpu_custom_call.1} parent=5 // pred_check_branch
        %219 = sbr.rel (%p217) target = $region28
      $region27: #{tpu_custom_call.1} parent=5 // pred_region
        // Predicated region
        $region29: #{tpu_custom_call.1} parent=27 // pred_check
          %p220 = pneg %p53
        $region30: #{tpu_custom_call.1} parent=27 // pred_check_branch
          %222 = sbr.rel (%p220) target = $region32
        $region31: #{tpu_custom_call.1} parent=27 // pred_region
          %s223 = sand.u32 %s43, 1
          %s224 = scalar_lea.sflag [#allocation4], %s223
          %s225 = sand.u32 %s43, 1
          %s226 = smul.addr %s225, 16
          %s227 = scalar_lea.vmem [#allocation3], %s226
          %s228 = smul.u32 4, %s27
          %s230 = ssub.s32 256, 256
          %231 = vsyncadd %s224, %s230
          %s232 = smul.addr %s26, 8
          %s233 = sadd.s32 %s228, %s232
          %s234 = smul.addr %s233, 64
          %s235 = scalar_lea.hbm %s0, %s234
          %s237 = sshll.u32 %s227, 4
          %s238 = int_to_ptr.vmem [resolvable:$true] %s237
          %240 = dma.hbm_to_vmem [thread:$0]  %s235, 256, %s238, %s224
        $region32: #{tpu_custom_call.1} parent=27 // pred_fallthru
          _
        // Predicated region
        $region33: #{tpu_custom_call.1} parent=27 // pred_check
          %p241 = pneg %p79
        $region34: #{tpu_custom_call.1} parent=27 // pred_check_branch
          %243 = sbr.rel (%p241) target = $region36
        $region35: #{tpu_custom_call.1} parent=27 // pred_region
          %s244 = sand.u32 %s19, 1
          %s245 = scalar_lea.sflag [#allocation7], %s244
          %s246 = sand.u32 %s69, 1
          %s247 = smul.addr %s246, 1024
          %s248 = scalar_lea.vmem [#allocation6], %s247
          %s249 = smul.u32 64, %s27
          %s251 = ssub.s32 16384, 16384
          %252 = vsyncadd %s245, %s251
          %s253 = smul.addr %s249, 4
          %s254 = smul.addr %s253, 64
          %s255 = scalar_lea.hbm %s1, %s254
          %s256 = sshll.u32 %s248, 4
          %s257 = int_to_ptr.vmem [resolvable:$true] %s256
          %262 = dma.hbm_to_vmem [thread:$0]  %s255, 16384, %s257, %s245, 256, 256, 16
        $region36: #{tpu_custom_call.1} parent=27 // pred_fallthru
          _
      $region28: #{tpu_custom_call.1} parent=5 // pred_fallthru
        _
      %p263 = scmp.le.s32.totalorder 1, %s19
      %p264 = scmp.lt.s32.totalorder %s19, 3
      %p265 = pnand %p263, %p264
      %p266 = pneg %p265
      // Predicated region
      $region37: #{tpu_custom_call.1} parent=5 // pred_check
        _
      $region38: #{tpu_custom_call.1} parent=5 // pred_check_branch
        %268 = sbr.rel (%p265) target = $region40
      $region39: #{tpu_custom_call.1} parent=5 // pred_region
        %s269 = ssub.s32 %s19, 1
        %s270 = sand.u32 %s46, 1
        %s271 = scalar_lea.sflag [#allocation4], %s270
        %s272 = sand.u32 %s46, 1
        %s273 = smul.addr %s272, 16
        %s274 = scalar_lea.vmem [#allocation3], %s273
        // Predicated region
        $region41: #{tpu_custom_call.1} parent=39 // pred_check
          %p275 = pneg %p59
        $region42: #{tpu_custom_call.1} parent=39 // pred_check_branch
          %277 = sbr.rel (%p275) target = $region44
        $region43: #{tpu_custom_call.1} parent=39 // pred_region
          %278 = dma.done %s271, 256
        $region44: #{tpu_custom_call.1} parent=39 // pred_fallthru
          _
        %s279 = sand.u32 %s24, 1
        %s280 = scalar_lea.sflag [#allocation7], %s279
        %s281 = sand.u32 %s72, 1
        %s282 = smul.addr %s281, 1024
        %s283 = scalar_lea.vmem [#allocation6], %s282
        // Predicated region
        $region45: #{tpu_custom_call.1} parent=39 // pred_check
          %p284 = pneg %p85
        $region46: #{tpu_custom_call.1} parent=39 // pred_check_branch
          %286 = sbr.rel (%p284) target = $region48
        $region47: #{tpu_custom_call.1} parent=39 // pred_region
          %287 = dma.done %s280, 16384
        $region48: #{tpu_custom_call.1} parent=39 // pred_fallthru
          _
        // Predicated region
        $region49: #{tpu_custom_call.1} parent=39 // pred_check
          %p288 = pneg %p106
        $region50: #{tpu_custom_call.1} parent=39 // pred_check_branch
          %290 = sbr.rel (%p288) target = $region52
        $region51: #{tpu_custom_call.1} parent=39 // pred_region
          %291 = dma.done [#allocation7], 64
        $region52: #{tpu_custom_call.1} parent=39 // pred_fallthru
          _
        // Predicated region
        $region53: #{tpu_custom_call.1} parent=39 // pred_check
          %p292 = pneg %p127
        $region54: #{tpu_custom_call.1} parent=39 // pred_check_branch
          %294 = sbr.rel (%p292) target = $region56
        $region55: #{tpu_custom_call.1} parent=39 // pred_region
          %295 = dma.done [#allocation10], 4096
        $region56: #{tpu_custom_call.1} parent=39 // pred_fallthru
          _
        %s296 = sand.u32 %s46, 1
        %s297 = scalar_lea.sflag [#allocation4], %s296
        %s298 = sand.u32 %s46, 1
        %s299 = smul.addr %s298, 16
        %s300 = scalar_lea.vmem [#allocation3], %s299
        %p301 = pneg %p59
        %p302 = pneg %p56
        %s303 = sand.u32 %s24, 1
        %s304 = scalar_lea.sflag [#allocation7], %s303
        %s305 = sand.u32 %s72, 1
        %s306 = smul.addr %s305, 1024
        %s307 = scalar_lea.vmem [#allocation6], %s306
        %p308 = pneg %p85
        %p309 = pneg %p82
        %p310 = pneg %p106
        %p311 = pneg %p103
        %p312 = pneg %p127
        %p313 = pneg %p124
        %p314 = pneg %p148
        %p315 = pneg %p145
        %p316 = pneg %p174
        %p317 = pneg %p171
        %s318 = smul.u32 4, %s29
        %s319 = smul.u32 64, %s29
        %p321 = scmp.eq.s32.totalorder %s29, 0
        // Predicated region
        $region57: #{tpu_custom_call.1} parent=39 // pred_check
          %p322 = pneg %p321
        $region58: #{tpu_custom_call.1} parent=39 // pred_check_branch
          %324 = sbr.rel (%p322) target = $region60
        $region59: #{tpu_custom_call.1} parent=39 // pred_region
          %325 = vst [vmem:[#allocation2] sm:$0xff] 0.0
          %326 = vst [vmem:[#allocation2 + $0x8] sm:$0xff] 0.0
          %327 = vst [vmem:[#allocation2 + $0x10] sm:$0xff] 0.0
          %328 = vst [vmem:[#allocation2 + $0x18] sm:$0xff] 0.0
        $region60: #{tpu_custom_call.1} parent=39 // pred_fallthru
          _
        %v329 = vld [vmem:[#allocation2] sm:$0xff]
        %v330 = vld [vmem:[#allocation2 + $0x8] sm:$0xff]
        %v331 = vld [vmem:[#allocation2 + $0x10] sm:$0xff]
        %v332 = vld [vmem:[#allocation2 + $0x18] sm:$0xff]
        %v333 = vld [vmem:[%s274] sm:$0xff]
        %v334 = vld [vmem:[%s274 + $0x8] sm:$0xff]
        %v335 = vld [vmem:[%s283] sm:$0xff]
        %v336 = vld [vmem:[%s283 + $0x8] sm:$0xff]
        %v337 = vld [vmem:[%s283 + $0x10] sm:$0xff]
        %v338 = vld [vmem:[%s283 + $0x18] sm:$0xff]
        %v339 = vld [vmem:[%s283 + $0x20] sm:$0xff]
        %v340 = vld [vmem:[%s283 + $0x28] sm:$0xff]
        %v341 = vld [vmem:[%s283 + $0x30] sm:$0xff]
        %v342 = vld [vmem:[%s283 + $0x38] sm:$0xff]
        %v343 = vld [vmem:[%s283 + $0x40] sm:$0xff]
        %v344 = vld [vmem:[%s283 + $0x48] sm:$0xff]
        %v345 = vld [vmem:[%s283 + $0x50] sm:$0xff]
        %v346 = vld [vmem:[%s283 + $0x58] sm:$0xff]
        %v347 = vld [vmem:[%s283 + $0x60] sm:$0xff]
        %v348 = vld [vmem:[%s283 + $0x68] sm:$0xff]
        %v349 = vld [vmem:[%s283 + $0x70] sm:$0xff]
        %v350 = vld [vmem:[%s283 + $0x78] sm:$0xff]
        %v351 = vld [vmem:[%s283 + $0x80] sm:$0xff]
        %v352 = vld [vmem:[%s283 + $0x88] sm:$0xff]
        %v353 = vld [vmem:[%s283 + $0x90] sm:$0xff]
        %v354 = vld [vmem:[%s283 + $0x98] sm:$0xff]
        %v355 = vld [vmem:[%s283 + $0xa0] sm:$0xff]
        %v356 = vld [vmem:[%s283 + $0xa8] sm:$0xff]
        %v357 = vld [vmem:[%s283 + $0xb0] sm:$0xff]
        %v358 = vld [vmem:[%s283 + $0xb8] sm:$0xff]
        %v359 = vld [vmem:[%s283 + $0xc0] sm:$0xff]
        %v360 = vld [vmem:[%s283 + $0xc8] sm:$0xff]
        %v361 = vld [vmem:[%s283 + $0xd0] sm:$0xff]
        %v362 = vld [vmem:[%s283 + $0xd8] sm:$0xff]
        %v363 = vld [vmem:[%s283 + $0xe0] sm:$0xff]
        %v364 = vld [vmem:[%s283 + $0xe8] sm:$0xff]
        %v365 = vld [vmem:[%s283 + $0xf0] sm:$0xff]
        %v366 = vld [vmem:[%s283 + $0xf8] sm:$0xff]
        %v367 = vld [vmem:[%s283 + $0x100] sm:$0xff]
        %v368 = vld [vmem:[%s283 + $0x108] sm:$0xff]
        %v369 = vld [vmem:[%s283 + $0x110] sm:$0xff]
        %v370 = vld [vmem:[%s283 + $0x118] sm:$0xff]
        %v371 = vld [vmem:[%s283 + $0x120] sm:$0xff]
        %v372 = vld [vmem:[%s283 + $0x128] sm:$0xff]
        %v373 = vld [vmem:[%s283 + $0x130] sm:$0xff]
        %v374 = vld [vmem:[%s283 + $0x138] sm:$0xff]
        %v375 = vld [vmem:[%s283 + $0x140] sm:$0xff]
        %v376 = vld [vmem:[%s283 + $0x148] sm:$0xff]
        %v377 = vld [vmem:[%s283 + $0x150] sm:$0xff]
        %v378 = vld [vmem:[%s283 + $0x158] sm:$0xff]
        %v379 = vld [vmem:[%s283 + $0x160] sm:$0xff]
        %v380 = vld [vmem:[%s283 + $0x168] sm:$0xff]
        %v381 = vld [vmem:[%s283 + $0x170] sm:$0xff]
        %v382 = vld [vmem:[%s283 + $0x178] sm:$0xff]
        %v383 = vld [vmem:[%s283 + $0x180] sm:$0xff]
        %v384 = vld [vmem:[%s283 + $0x188] sm:$0xff]
        %v385 = vld [vmem:[%s283 + $0x190] sm:$0xff]
        %v386 = vld [vmem:[%s283 + $0x198] sm:$0xff]
        %v387 = vld [vmem:[%s283 + $0x1a0] sm:$0xff]
        %v388 = vld [vmem:[%s283 + $0x1a8] sm:$0xff]
        %v389 = vld [vmem:[%s283 + $0x1b0] sm:$0xff]
        %v390 = vld [vmem:[%s283 + $0x1b8] sm:$0xff]
        %v391 = vld [vmem:[%s283 + $0x1c0] sm:$0xff]
        %v392 = vld [vmem:[%s283 + $0x1c8] sm:$0xff]
        %v393 = vld [vmem:[%s283 + $0x1d0] sm:$0xff]
        %v394 = vld [vmem:[%s283 + $0x1d8] sm:$0xff]
        %v395 = vld [vmem:[%s283 + $0x1e0] sm:$0xff]
        %v396 = vld [vmem:[%s283 + $0x1e8] sm:$0xff]
        %v397 = vld [vmem:[%s283 + $0x1f0] sm:$0xff]
        %v398 = vld [vmem:[%s283 + $0x1f8] sm:$0xff]
        %v399 = vld [vmem:[%s283 + $0x200] sm:$0xff]
        %v400 = vld [vmem:[%s283 + $0x208] sm:$0xff]
        %v401 = vld [vmem:[%s283 + $0x210] sm:$0xff]
        %v402 = vld [vmem:[%s283 + $0x218] sm:$0xff]
        %v403 = vld [vmem:[%s283 + $0x220] sm:$0xff]
        %v404 = vld [vmem:[%s283 + $0x228] sm:$0xff]
        %v405 = vld [vmem:[%s283 + $0x230] sm:$0xff]
        %v406 = vld [vmem:[%s283 + $0x238] sm:$0xff]
        %v407 = vld [vmem:[%s283 + $0x240] sm:$0xff]
        %v408 = vld [vmem:[%s283 + $0x248] sm:$0xff]
        %v409 = vld [vmem:[%s283 + $0x250] sm:$0xff]
        %v410 = vld [vmem:[%s283 + $0x258] sm:$0xff]
        %v411 = vld [vmem:[%s283 + $0x260] sm:$0xff]
        %v412 = vld [vmem:[%s283 + $0x268] sm:$0xff]
        %v413 = vld [vmem:[%s283 + $0x270] sm:$0xff]
        %v414 = vld [vmem:[%s283 + $0x278] sm:$0xff]
        %v415 = vld [vmem:[%s283 + $0x280] sm:$0xff]
        %v416 = vld [vmem:[%s283 + $0x288] sm:$0xff]
        %v417 = vld [vmem:[%s283 + $0x290] sm:$0xff]
        %v418 = vld [vmem:[%s283 + $0x298] sm:$0xff]
        %v419 = vld [vmem:[%s283 + $0x2a0] sm:$0xff]
        %v420 = vld [vmem:[%s283 + $0x2a8] sm:$0xff]
        %v421 = vld [vmem:[%s283 + $0x2b0] sm:$0xff]
        %v422 = vld [vmem:[%s283 + $0x2b8] sm:$0xff]
        %v423 = vld [vmem:[%s283 + $0x2c0] sm:$0xff]
        %v424 = vld [vmem:[%s283 + $0x2c8] sm:$0xff]
        %v425 = vld [vmem:[%s283 + $0x2d0] sm:$0xff]
        %v426 = vld [vmem:[%s283 + $0x2d8] sm:$0xff]
        %v427 = vld [vmem:[%s283 + $0x2e0] sm:$0xff]
        %v428 = vld [vmem:[%s283 + $0x2e8] sm:$0xff]
        %v429 = vld [vmem:[%s283 + $0x2f0] sm:$0xff]
        %v430 = vld [vmem:[%s283 + $0x2f8] sm:$0xff]
        %v431 = vld [vmem:[%s283 + $0x300] sm:$0xff]
        %v432 = vld [vmem:[%s283 + $0x308] sm:$0xff]
        %v433 = vld [vmem:[%s283 + $0x310] sm:$0xff]
        %v434 = vld [vmem:[%s283 + $0x318] sm:$0xff]
        %v435 = vld [vmem:[%s283 + $0x320] sm:$0xff]
        %v436 = vld [vmem:[%s283 + $0x328] sm:$0xff]
        %v437 = vld [vmem:[%s283 + $0x330] sm:$0xff]
        %v438 = vld [vmem:[%s283 + $0x338] sm:$0xff]
        %v439 = vld [vmem:[%s283 + $0x340] sm:$0xff]
        %v440 = vld [vmem:[%s283 + $0x348] sm:$0xff]
        %v441 = vld [vmem:[%s283 + $0x350] sm:$0xff]
        %v442 = vld [vmem:[%s283 + $0x358] sm:$0xff]
        %v443 = vld [vmem:[%s283 + $0x360] sm:$0xff]
        %v444 = vld [vmem:[%s283 + $0x368] sm:$0xff]
        %v445 = vld [vmem:[%s283 + $0x370] sm:$0xff]
        %v446 = vld [vmem:[%s283 + $0x378] sm:$0xff]
        %v447 = vld [vmem:[%s283 + $0x380] sm:$0xff]
        %v448 = vld [vmem:[%s283 + $0x388] sm:$0xff]
        %v449 = vld [vmem:[%s283 + $0x390] sm:$0xff]
        %v450 = vld [vmem:[%s283 + $0x398] sm:$0xff]
        %v451 = vld [vmem:[%s283 + $0x3a0] sm:$0xff]
        %v452 = vld [vmem:[%s283 + $0x3a8] sm:$0xff]
        %v453 = vld [vmem:[%s283 + $0x3b0] sm:$0xff]
        %v454 = vld [vmem:[%s283 + $0x3b8] sm:$0xff]
        %v455 = vld [vmem:[%s283 + $0x3c0] sm:$0xff]
        %v456 = vld [vmem:[%s283 + $0x3c8] sm:$0xff]
        %v457 = vld [vmem:[%s283 + $0x3d0] sm:$0xff]
        %v458 = vld [vmem:[%s283 + $0x3d8] sm:$0xff]
        %v459 = vld [vmem:[%s283 + $0x3e0] sm:$0xff]
        %v460 = vld [vmem:[%s283 + $0x3e8] sm:$0xff]
        %v461 = vld [vmem:[%s283 + $0x3f0] sm:$0xff]
        %v462 = vld [vmem:[%s283 + $0x3f8] sm:$0xff]
        %v465 = vunpack.c.l.b16 %v333
        %v466 = vunpack.c.h.b16 %v333
        %v467 = vunpack.c.l.b16 %v334
        %v468 = vunpack.c.h.b16 %v334
        %v469 = vpack.c.b16 %v465, %v465
        %v470 = vpack.c.b16 %v466, %v466
        %v471 = vpack.c.b16 %v467, %v467
        %v472 = vpack.c.b16 %v468, %v468
        %v605 = vunpack.c.l.b16 %v335
        %v606 = vunpack.c.h.b16 %v335
        %v607 = vunpack.c.l.b16 %v336
        %v608 = vunpack.c.h.b16 %v336
        %v609 = vunpack.c.l.b16 %v337
        %v610 = vunpack.c.h.b16 %v337
        %v611 = vunpack.c.l.b16 %v338
        %v612 = vunpack.c.h.b16 %v338
        %v613 = vunpack.c.l.b16 %v339
        %v614 = vunpack.c.h.b16 %v339
        %v615 = vunpack.c.l.b16 %v340
        %v616 = vunpack.c.h.b16 %v340
        %v617 = vunpack.c.l.b16 %v341
        %v618 = vunpack.c.h.b16 %v341
        %v619 = vunpack.c.l.b16 %v342
        %v620 = vunpack.c.h.b16 %v342
        %v621 = vunpack.c.l.b16 %v343
        %v622 = vunpack.c.h.b16 %v343
        %v623 = vunpack.c.l.b16 %v344
        %v624 = vunpack.c.h.b16 %v344
        %v625 = vunpack.c.l.b16 %v345
        %v626 = vunpack.c.h.b16 %v345
        %v627 = vunpack.c.l.b16 %v346
        %v628 = vunpack.c.h.b16 %v346
        %v629 = vunpack.c.l.b16 %v347
        %v630 = vunpack.c.h.b16 %v347
        %v631 = vunpack.c.l.b16 %v348
        %v632 = vunpack.c.h.b16 %v348
        %v633 = vunpack.c.l.b16 %v349
        %v634 = vunpack.c.h.b16 %v349
        %v635 = vunpack.c.l.b16 %v350
        %v636 = vunpack.c.h.b16 %v350
        %v637 = vunpack.c.l.b16 %v351
        %v638 = vunpack.c.h.b16 %v351
        %v639 = vunpack.c.l.b16 %v352
        %v640 = vunpack.c.h.b16 %v352
        %v641 = vunpack.c.l.b16 %v353
        %v642 = vunpack.c.h.b16 %v353
        %v643 = vunpack.c.l.b16 %v354
        %v644 = vunpack.c.h.b16 %v354
        %v645 = vunpack.c.l.b16 %v355
        %v646 = vunpack.c.h.b16 %v355
        %v647 = vunpack.c.l.b16 %v356
        %v648 = vunpack.c.h.b16 %v356
        %v649 = vunpack.c.l.b16 %v357
        %v650 = vunpack.c.h.b16 %v357
        %v651 = vunpack.c.l.b16 %v358
        %v652 = vunpack.c.h.b16 %v358
        %v653 = vunpack.c.l.b16 %v359
        %v654 = vunpack.c.h.b16 %v359
        %v655 = vunpack.c.l.b16 %v360
        %v656 = vunpack.c.h.b16 %v360
        %v657 = vunpack.c.l.b16 %v361
        %v658 = vunpack.c.h.b16 %v361
        %v659 = vunpack.c.l.b16 %v362
        %v660 = vunpack.c.h.b16 %v362
        %v661 = vunpack.c.l.b16 %v363
        %v662 = vunpack.c.h.b16 %v363
        %v663 = vunpack.c.l.b16 %v364
        %v664 = vunpack.c.h.b16 %v364
        %v665 = vunpack.c.l.b16 %v365
        %v666 = vunpack.c.h.b16 %v365
        %v667 = vunpack.c.l.b16 %v366
        %v668 = vunpack.c.h.b16 %v366
        %v669 = vunpack.c.l.b16 %v367
        %v670 = vunpack.c.h.b16 %v367
        %v671 = vunpack.c.l.b16 %v368
        %v672 = vunpack.c.h.b16 %v368
        %v673 = vunpack.c.l.b16 %v369
        %v674 = vunpack.c.h.b16 %v369
        %v675 = vunpack.c.l.b16 %v370
        %v676 = vunpack.c.h.b16 %v370
        %v677 = vunpack.c.l.b16 %v371
        %v678 = vunpack.c.h.b16 %v371
        %v679 = vunpack.c.l.b16 %v372
        %v680 = vunpack.c.h.b16 %v372
        %v681 = vunpack.c.l.b16 %v373
        %v682 = vunpack.c.h.b16 %v373
        %v683 = vunpack.c.l.b16 %v374
        %v684 = vunpack.c.h.b16 %v374
        %v685 = vunpack.c.l.b16 %v375
        %v686 = vunpack.c.h.b16 %v375
        %v687 = vunpack.c.l.b16 %v376
        %v688 = vunpack.c.h.b16 %v376
        %v689 = vunpack.c.l.b16 %v377
        %v690 = vunpack.c.h.b16 %v377
        %v691 = vunpack.c.l.b16 %v378
        %v692 = vunpack.c.h.b16 %v378
        %v693 = vunpack.c.l.b16 %v379
        %v694 = vunpack.c.h.b16 %v379
        %v695 = vunpack.c.l.b16 %v380
        %v696 = vunpack.c.h.b16 %v380
        %v697 = vunpack.c.l.b16 %v381
        %v698 = vunpack.c.h.b16 %v381
        %v699 = vunpack.c.l.b16 %v382
        %v700 = vunpack.c.h.b16 %v382
        %v701 = vunpack.c.l.b16 %v383
        %v702 = vunpack.c.h.b16 %v383
        %v703 = vunpack.c.l.b16 %v384
        %v704 = vunpack.c.h.b16 %v384
        %v705 = vunpack.c.l.b16 %v385
        %v706 = vunpack.c.h.b16 %v385
        %v707 = vunpack.c.l.b16 %v386
        %v708 = vunpack.c.h.b16 %v386
        %v709 = vunpack.c.l.b16 %v387
        %v710 = vunpack.c.h.b16 %v387
        %v711 = vunpack.c.l.b16 %v388
        %v712 = vunpack.c.h.b16 %v388
        %v713 = vunpack.c.l.b16 %v389
        %v714 = vunpack.c.h.b16 %v389
        %v715 = vunpack.c.l.b16 %v390
        %v716 = vunpack.c.h.b16 %v390
        %v717 = vunpack.c.l.b16 %v391
        %v718 = vunpack.c.h.b16 %v391
        %v719 = vunpack.c.l.b16 %v392
        %v720 = vunpack.c.h.b16 %v392
        %v721 = vunpack.c.l.b16 %v393
        %v722 = vunpack.c.h.b16 %v393
        %v723 = vunpack.c.l.b16 %v394
        %v724 = vunpack.c.h.b16 %v394
        %v725 = vunpack.c.l.b16 %v395
        %v726 = vunpack.c.h.b16 %v395
        %v727 = vunpack.c.l.b16 %v396
        %v728 = vunpack.c.h.b16 %v396
        %v729 = vunpack.c.l.b16 %v397
        %v730 = vunpack.c.h.b16 %v397
        %v731 = vunpack.c.l.b16 %v398
        %v732 = vunpack.c.h.b16 %v398
        %v733 = vunpack.c.l.b16 %v399
        %v734 = vunpack.c.h.b16 %v399
        %v735 = vunpack.c.l.b16 %v400
        %v736 = vunpack.c.h.b16 %v400
        %v737 = vunpack.c.l.b16 %v401
        %v738 = vunpack.c.h.b16 %v401
        %v739 = vunpack.c.l.b16 %v402
        %v740 = vunpack.c.h.b16 %v402
        %v741 = vunpack.c.l.b16 %v403
        %v742 = vunpack.c.h.b16 %v403
        %v743 = vunpack.c.l.b16 %v404
        %v744 = vunpack.c.h.b16 %v404
        %v745 = vunpack.c.l.b16 %v405
        %v746 = vunpack.c.h.b16 %v405
        %v747 = vunpack.c.l.b16 %v406
        %v748 = vunpack.c.h.b16 %v406
        %v749 = vunpack.c.l.b16 %v407
        %v750 = vunpack.c.h.b16 %v407
        %v751 = vunpack.c.l.b16 %v408
        %v752 = vunpack.c.h.b16 %v408
        %v753 = vunpack.c.l.b16 %v409
        %v754 = vunpack.c.h.b16 %v409
        %v755 = vunpack.c.l.b16 %v410
        %v756 = vunpack.c.h.b16 %v410
        %v757 = vunpack.c.l.b16 %v411
        %v758 = vunpack.c.h.b16 %v411
        %v759 = vunpack.c.l.b16 %v412
        %v760 = vunpack.c.h.b16 %v412
        %v761 = vunpack.c.l.b16 %v413
        %v762 = vunpack.c.h.b16 %v413
        %v763 = vunpack.c.l.b16 %v414
        %v764 = vunpack.c.h.b16 %v414
        %v765 = vunpack.c.l.b16 %v415
        %v766 = vunpack.c.h.b16 %v415
        %v767 = vunpack.c.l.b16 %v416
        %v768 = vunpack.c.h.b16 %v416
        %v769 = vunpack.c.l.b16 %v417
        %v770 = vunpack.c.h.b16 %v417
        %v771 = vunpack.c.l.b16 %v418
        %v772 = vunpack.c.h.b16 %v418
        %v773 = vunpack.c.l.b16 %v419
        %v774 = vunpack.c.h.b16 %v419
        %v775 = vunpack.c.l.b16 %v420
        %v776 = vunpack.c.h.b16 %v420
        %v777 = vunpack.c.l.b16 %v421
        %v778 = vunpack.c.h.b16 %v421
        %v779 = vunpack.c.l.b16 %v422
        %v780 = vunpack.c.h.b16 %v422
        %v781 = vunpack.c.l.b16 %v423
        %v782 = vunpack.c.h.b16 %v423
        %v783 = vunpack.c.l.b16 %v424
        %v784 = vunpack.c.h.b16 %v424
        %v785 = vunpack.c.l.b16 %v425
        %v786 = vunpack.c.h.b16 %v425
        %v787 = vunpack.c.l.b16 %v426
        %v788 = vunpack.c.h.b16 %v426
        %v789 = vunpack.c.l.b16 %v427
        %v790 = vunpack.c.h.b16 %v427
        %v791 = vunpack.c.l.b16 %v428
        %v792 = vunpack.c.h.b16 %v428
        %v793 = vunpack.c.l.b16 %v429
        %v794 = vunpack.c.h.b16 %v429
        %v795 = vunpack.c.l.b16 %v430
        %v796 = vunpack.c.h.b16 %v430
        %v797 = vunpack.c.l.b16 %v431
        %v798 = vunpack.c.h.b16 %v431
        %v799 = vunpack.c.l.b16 %v432
        %v800 = vunpack.c.h.b16 %v432
        %v801 = vunpack.c.l.b16 %v433
        %v802 = vunpack.c.h.b16 %v433
        %v803 = vunpack.c.l.b16 %v434
        %v804 = vunpack.c.h.b16 %v434
        %v805 = vunpack.c.l.b16 %v435
        %v806 = vunpack.c.h.b16 %v435
        %v807 = vunpack.c.l.b16 %v436
        %v808 = vunpack.c.h.b16 %v436
        %v809 = vunpack.c.l.b16 %v437
        %v810 = vunpack.c.h.b16 %v437
        %v811 = vunpack.c.l.b16 %v438
        %v812 = vunpack.c.h.b16 %v438
        %v813 = vunpack.c.l.b16 %v439
        %v814 = vunpack.c.h.b16 %v439
        %v815 = vunpack.c.l.b16 %v440
        %v816 = vunpack.c.h.b16 %v440
        %v817 = vunpack.c.l.b16 %v441
        %v818 = vunpack.c.h.b16 %v441
        %v819 = vunpack.c.l.b16 %v442
        %v820 = vunpack.c.h.b16 %v442
        %v821 = vunpack.c.l.b16 %v443
        %v822 = vunpack.c.h.b16 %v443
        %v823 = vunpack.c.l.b16 %v444
        %v824 = vunpack.c.h.b16 %v444
        %v825 = vunpack.c.l.b16 %v445
        %v826 = vunpack.c.h.b16 %v445
        %v827 = vunpack.c.l.b16 %v446
        %v828 = vunpack.c.h.b16 %v446
        %v829 = vunpack.c.l.b16 %v447
        %v830 = vunpack.c.h.b16 %v447
        %v831 = vunpack.c.l.b16 %v448
        %v832 = vunpack.c.h.b16 %v448
        %v833 = vunpack.c.l.b16 %v449
        %v834 = vunpack.c.h.b16 %v449
        %v835 = vunpack.c.l.b16 %v450
        %v836 = vunpack.c.h.b16 %v450
        %v837 = vunpack.c.l.b16 %v451
        %v838 = vunpack.c.h.b16 %v451
        %v839 = vunpack.c.l.b16 %v452
        %v840 = vunpack.c.h.b16 %v452
        %v841 = vunpack.c.l.b16 %v453
        %v842 = vunpack.c.h.b16 %v453
        %v843 = vunpack.c.l.b16 %v454
        %v844 = vunpack.c.h.b16 %v454
        %v845 = vunpack.c.l.b16 %v455
        %v846 = vunpack.c.h.b16 %v455
        %v847 = vunpack.c.l.b16 %v456
        %v848 = vunpack.c.h.b16 %v456
        %v849 = vunpack.c.l.b16 %v457
        %v850 = vunpack.c.h.b16 %v457
        %v851 = vunpack.c.l.b16 %v458
        %v852 = vunpack.c.h.b16 %v458
        %v853 = vunpack.c.l.b16 %v459
        %v854 = vunpack.c.h.b16 %v459
        %v855 = vunpack.c.l.b16 %v460
        %v856 = vunpack.c.h.b16 %v460
        %v857 = vunpack.c.l.b16 %v461
        %v858 = vunpack.c.h.b16 %v461
        %v859 = vunpack.c.l.b16 %v462
        %v860 = vunpack.c.h.b16 %v462
        %v861 = vpack.c.b16 %v609, %v605
        %v862 = vpack.c.b16 %v610, %v606
        %v863 = vpack.c.b16 %v611, %v607
        %v864 = vpack.c.b16 %v612, %v608
        %v865 = vpack.c.b16 %v617, %v613
        %v866 = vpack.c.b16 %v618, %v614
        %v867 = vpack.c.b16 %v619, %v615
        %v868 = vpack.c.b16 %v620, %v616
        %v869 = vpack.c.b16 %v625, %v621
        %v870 = vpack.c.b16 %v626, %v622
        %v871 = vpack.c.b16 %v627, %v623
        %v872 = vpack.c.b16 %v628, %v624
        %v873 = vpack.c.b16 %v633, %v629
        %v874 = vpack.c.b16 %v634, %v630
        %v875 = vpack.c.b16 %v635, %v631
        %v876 = vpack.c.b16 %v636, %v632
        %v877 = vpack.c.b16 %v641, %v637
        %v878 = vpack.c.b16 %v642, %v638
        %v879 = vpack.c.b16 %v643, %v639
        %v880 = vpack.c.b16 %v644, %v640
        %v881 = vpack.c.b16 %v649, %v645
        %v882 = vpack.c.b16 %v650, %v646
        %v883 = vpack.c.b16 %v651, %v647
        %v884 = vpack.c.b16 %v652, %v648
        %v885 = vpack.c.b16 %v657, %v653
        %v886 = vpack.c.b16 %v658, %v654
        %v887 = vpack.c.b16 %v659, %v655
        %v888 = vpack.c.b16 %v660, %v656
        %v889 = vpack.c.b16 %v665, %v661
        %v890 = vpack.c.b16 %v666, %v662
        %v891 = vpack.c.b16 %v667, %v663
        %v892 = vpack.c.b16 %v668, %v664
        %v893 = vpack.c.b16 %v673, %v669
        %v894 = vpack.c.b16 %v674, %v670
        %v895 = vpack.c.b16 %v675, %v671
        %v896 = vpack.c.b16 %v676, %v672
        %v897 = vpack.c.b16 %v681, %v677
        %v898 = vpack.c.b16 %v682, %v678
        %v899 = vpack.c.b16 %v683, %v679
        %v900 = vpack.c.b16 %v684, %v680
        %v901 = vpack.c.b16 %v689, %v685
        %v902 = vpack.c.b16 %v690, %v686
        %v903 = vpack.c.b16 %v691, %v687
        %v904 = vpack.c.b16 %v692, %v688
        %v905 = vpack.c.b16 %v697, %v693
        %v906 = vpack.c.b16 %v698, %v694
        %v907 = vpack.c.b16 %v699, %v695
        %v908 = vpack.c.b16 %v700, %v696
        %v909 = vpack.c.b16 %v705, %v701
        %v910 = vpack.c.b16 %v706, %v702
        %v911 = vpack.c.b16 %v707, %v703
        %v912 = vpack.c.b16 %v708, %v704
        %v913 = vpack.c.b16 %v713, %v709
        %v914 = vpack.c.b16 %v714, %v710
        %v915 = vpack.c.b16 %v715, %v711
        %v916 = vpack.c.b16 %v716, %v712
        %v917 = vpack.c.b16 %v721, %v717
        %v918 = vpack.c.b16 %v722, %v718
        %v919 = vpack.c.b16 %v723, %v719
        %v920 = vpack.c.b16 %v724, %v720
        %v921 = vpack.c.b16 %v729, %v725
        %v922 = vpack.c.b16 %v730, %v726
        %v923 = vpack.c.b16 %v731, %v727
        %v924 = vpack.c.b16 %v732, %v728
        %v925 = vpack.c.b16 %v737, %v733
        %v926 = vpack.c.b16 %v738, %v734
        %v927 = vpack.c.b16 %v739, %v735
        %v928 = vpack.c.b16 %v740, %v736
        %v929 = vpack.c.b16 %v745, %v741
        %v930 = vpack.c.b16 %v746, %v742
        %v931 = vpack.c.b16 %v747, %v743
        %v932 = vpack.c.b16 %v748, %v744
        %v933 = vpack.c.b16 %v753, %v749
        %v934 = vpack.c.b16 %v754, %v750
        %v935 = vpack.c.b16 %v755, %v751
        %v936 = vpack.c.b16 %v756, %v752
        %v937 = vpack.c.b16 %v761, %v757
        %v938 = vpack.c.b16 %v762, %v758
        %v939 = vpack.c.b16 %v763, %v759
        %v940 = vpack.c.b16 %v764, %v760
        %v941 = vpack.c.b16 %v769, %v765
        %v942 = vpack.c.b16 %v770, %v766
        %v943 = vpack.c.b16 %v771, %v767
        %v944 = vpack.c.b16 %v772, %v768
        %v945 = vpack.c.b16 %v777, %v773
        %v946 = vpack.c.b16 %v778, %v774
        %v947 = vpack.c.b16 %v779, %v775
        %v948 = vpack.c.b16 %v780, %v776
        %v949 = vpack.c.b16 %v785, %v781
        %v950 = vpack.c.b16 %v786, %v782
        %v951 = vpack.c.b16 %v787, %v783
        %v952 = vpack.c.b16 %v788, %v784
        %v953 = vpack.c.b16 %v793, %v789
        %v954 = vpack.c.b16 %v794, %v790
        %v955 = vpack.c.b16 %v795, %v791
        %v956 = vpack.c.b16 %v796, %v792
        %v957 = vpack.c.b16 %v801, %v797
        %v958 = vpack.c.b16 %v802, %v798
        %v959 = vpack.c.b16 %v803, %v799
        %v960 = vpack.c.b16 %v804, %v800
        %v961 = vpack.c.b16 %v809, %v805
        %v962 = vpack.c.b16 %v810, %v806
        %v963 = vpack.c.b16 %v811, %v807
        %v964 = vpack.c.b16 %v812, %v808
        %v965 = vpack.c.b16 %v817, %v813
        %v966 = vpack.c.b16 %v818, %v814
        %v967 = vpack.c.b16 %v819, %v815
        %v968 = vpack.c.b16 %v820, %v816
        %v969 = vpack.c.b16 %v825, %v821
        %v970 = vpack.c.b16 %v826, %v822
        %v971 = vpack.c.b16 %v827, %v823
        %v972 = vpack.c.b16 %v828, %v824
        %v973 = vpack.c.b16 %v833, %v829
        %v974 = vpack.c.b16 %v834, %v830
        %v975 = vpack.c.b16 %v835, %v831
        %v976 = vpack.c.b16 %v836, %v832
        %v977 = vpack.c.b16 %v841, %v837
        %v978 = vpack.c.b16 %v842, %v838
        %v979 = vpack.c.b16 %v843, %v839
        %v980 = vpack.c.b16 %v844, %v840
        %v981 = vpack.c.b16 %v849, %v845
        %v982 = vpack.c.b16 %v850, %v846
        %v983 = vpack.c.b16 %v851, %v847
        %v984 = vpack.c.b16 %v852, %v848
        %v985 = vpack.c.b16 %v857, %v853
        %v986 = vpack.c.b16 %v858, %v854
        %v987 = vpack.c.b16 %v859, %v855
        %v988 = vpack.c.b16 %v860, %v856
        %1117 = vmatprep.subr.bf16.mxu0 %v890
        %1118 = vmatpush1.bf16.msra.mxu0 %v889
        %1119 = vmatprep.subr.bf16.mxu0 %v886
        %1120 = vmatpush1.bf16.msra.mxu0 %v885
        %1121 = vmatprep.subr.bf16.mxu0 %v882
        %1122 = vmatpush1.bf16.msra.mxu0 %v881
        %1123 = vmatprep.subr.bf16.mxu0 %v878
        %1124 = vmatpush1.bf16.msra.mxu0 %v877
        %1125 = vmatprep.subr.bf16.mxu0 %v874
        %1126 = vmatpush1.bf16.msra.mxu0 %v873
        %1127 = vmatprep.subr.bf16.mxu0 %v870
        %1128 = vmatpush1.bf16.msra.mxu0 %v869
        %1129 = vmatprep.subr.bf16.mxu0 %v866
        %1130 = vmatpush1.bf16.msra.mxu0 %v865
        %1131 = vmatprep.subr.bf16.mxu0 %v862
        %1132 = vmatpush1.bf16.msra.mxu0 %v861
        %1133 = vmatprep.subr.bf16.mxu0 %v922
        %1134 = vmatpush2.bf16.msra.mxu0 %v921
        %1135 = vmatprep.subr.bf16.mxu0 %v918
        %1136 = vmatpush2.bf16.msra.mxu0 %v917
        %1137 = vmatprep.subr.bf16.mxu0 %v914
        %1138 = vmatpush2.bf16.msra.mxu0 %v913
        %1139 = vmatprep.subr.bf16.mxu0 %v910
        %1140 = vmatpush2.bf16.msra.mxu0 %v909
        %1141 = vmatprep.subr.bf16.mxu0 %v906
        %1142 = vmatpush2.bf16.msra.mxu0 %v905
        %1143 = vmatprep.subr.bf16.mxu0 %v902
        %1144 = vmatpush2.bf16.msra.mxu0 %v901
        %1145 = vmatprep.subr.bf16.mxu0 %v898
        %1146 = vmatpush2.bf16.msra.mxu0 %v897
        %1147 = vmatprep.subr.bf16.mxu0 %v894
        %1148 = vmatpush2.bf16.msra.mxu0 %v893
        %1149 = vmatprep.mubr.bf16.mxu0 %v470
        %1150 = vmatmul.mubr.bf16.gmra.mxu0 %v469
        %v1151 = vpop.f32.mrf.mxu0
        %v1152 = vadd.f32 0.0, %v1151
        %v1153 = vpop.f32.mrf.mxu0
        %v1154 = vadd.f32 0.0, %v1153
        %v1155 = vpop.f32.mrf.mxu0
        %v1156 = vpop.f32.mrf.mxu0
        %1157 = vdwg.mxu0
        %1158 = vmatprep.subr.bf16.mxu0 %v954
        %1159 = vmatpush1.bf16.msra.mxu0 %v953
        %1160 = vmatprep.subr.bf16.mxu0 %v950
        %1161 = vmatpush1.bf16.msra.mxu0 %v949
        %1162 = vmatprep.subr.bf16.mxu0 %v946
        %1163 = vmatpush1.bf16.msra.mxu0 %v945
        %1164 = vmatprep.subr.bf16.mxu0 %v942
        %1165 = vmatpush1.bf16.msra.mxu0 %v941
        %1166 = vmatprep.subr.bf16.mxu0 %v938
        %1167 = vmatpush1.bf16.msra.mxu0 %v937
        %1168 = vmatprep.subr.bf16.mxu0 %v934
        %1169 = vmatpush1.bf16.msra.mxu0 %v933
        %1170 = vmatprep.subr.bf16.mxu0 %v930
        %1171 = vmatpush1.bf16.msra.mxu0 %v929
        %1172 = vmatprep.subr.bf16.mxu0 %v926
        %1173 = vmatpush1.bf16.msra.mxu0 %v925
        %1174 = vmatprep.subr.bf16.mxu0 %v986
        %1175 = vmatpush2.bf16.msra.mxu0 %v985
        %1176 = vmatprep.subr.bf16.mxu0 %v982
        %1177 = vmatpush2.bf16.msra.mxu0 %v981
        %1178 = vmatprep.subr.bf16.mxu0 %v978
        %1179 = vmatpush2.bf16.msra.mxu0 %v977
        %1180 = vmatprep.subr.bf16.mxu0 %v974
        %1181 = vmatpush2.bf16.msra.mxu0 %v973
        %1182 = vmatprep.subr.bf16.mxu0 %v970
        %1183 = vmatpush2.bf16.msra.mxu0 %v969
        %1184 = vmatprep.subr.bf16.mxu0 %v966
        %1185 = vmatpush2.bf16.msra.mxu0 %v965
        %1186 = vmatprep.subr.bf16.mxu0 %v962
        %1187 = vmatpush2.bf16.msra.mxu0 %v961
        %1188 = vmatprep.subr.bf16.mxu0 %v958
        %1189 = vmatpush2.bf16.msra.mxu0 %v957
        %1190 = vmatprep.mubr.bf16.mxu0 %v472
        %1191 = vmatmul.mubr.bf16.gmra.mxu0 %v471
        %v1192 = vpop.f32.mrf.mxu0
        %v1193 = vadd.f32 %v1152, %v1192
        %v1194 = vpop.f32.mrf.mxu0
        %v1195 = vadd.f32 %v1154, %v1194
        %v1196 = vpop.f32.mrf.mxu0
        %v1197 = vpop.f32.mrf.mxu0
        %1198 = vdwg.mxu0
        %1199 = vmatprep.subr.bf16.mxu0 %v892
        %1200 = vmatpush1.bf16.msra.mxu0 %v891
        %1201 = vmatprep.subr.bf16.mxu0 %v888
        %1202 = vmatpush1.bf16.msra.mxu0 %v887
        %1203 = vmatprep.subr.bf16.mxu0 %v884
        %1204 = vmatpush1.bf16.msra.mxu0 %v883
        %1205 = vmatprep.subr.bf16.mxu0 %v880
        %1206 = vmatpush1.bf16.msra.mxu0 %v879
        %1207 = vmatprep.subr.bf16.mxu0 %v876
        %1208 = vmatpush1.bf16.msra.mxu0 %v875
        %1209 = vmatprep.subr.bf16.mxu0 %v872
        %1210 = vmatpush1.bf16.msra.mxu0 %v871
        %1211 = vmatprep.subr.bf16.mxu0 %v868
        %1212 = vmatpush1.bf16.msra.mxu0 %v867
        %1213 = vmatprep.subr.bf16.mxu0 %v864
        %1214 = vmatpush1.bf16.msra.mxu0 %v863
        %1215 = vmatprep.subr.bf16.mxu0 %v924
        %1216 = vmatpush2.bf16.msra.mxu0 %v923
        %1217 = vmatprep.subr.bf16.mxu0 %v920
        %1218 = vmatpush2.bf16.msra.mxu0 %v919
        %1219 = vmatprep.subr.bf16.mxu0 %v916
        %1220 = vmatpush2.bf16.msra.mxu0 %v915
        %1221 = vmatprep.subr.bf16.mxu0 %v912
        %1222 = vmatpush2.bf16.msra.mxu0 %v911
        %1223 = vmatprep.subr.bf16.mxu0 %v908
        %1224 = vmatpush2.bf16.msra.mxu0 %v907
        %1225 = vmatprep.subr.bf16.mxu0 %v904
        %1226 = vmatpush2.bf16.msra.mxu0 %v903
        %1227 = vmatprep.subr.bf16.mxu0 %v900
        %1228 = vmatpush2.bf16.msra.mxu0 %v899
        %1229 = vmatprep.subr.bf16.mxu0 %v896
        %1230 = vmatpush2.bf16.msra.mxu0 %v895
        %1231 = vmatprep.mubr.bf16.mxu0 %v470
        %1232 = vmatmul.mubr.bf16.gmra.mxu0 %v469
        %v1233 = vpop.f32.mrf.mxu0
        %v1234 = vadd.f32 0.0, %v1233
        %v1235 = vpop.f32.mrf.mxu0
        %v1236 = vadd.f32 0.0, %v1235
        %v1237 = vpop.f32.mrf.mxu0
        %v1238 = vpop.f32.mrf.mxu0
        %1239 = vdwg.mxu0
        %1240 = vmatprep.subr.bf16.mxu0 %v956
        %1241 = vmatpush1.bf16.msra.mxu0 %v955
        %1242 = vmatprep.subr.bf16.mxu0 %v952
        %1243 = vmatpush1.bf16.msra.mxu0 %v951
        %1244 = vmatprep.subr.bf16.mxu0 %v948
        %1245 = vmatpush1.bf16.msra.mxu0 %v947
        %1246 = vmatprep.subr.bf16.mxu0 %v944
        %1247 = vmatpush1.bf16.msra.mxu0 %v943
        %1248 = vmatprep.subr.bf16.mxu0 %v940
        %1249 = vmatpush1.bf16.msra.mxu0 %v939
        %1250 = vmatprep.subr.bf16.mxu0 %v936
        %1251 = vmatpush1.bf16.msra.mxu0 %v935
        %1252 = vmatprep.subr.bf16.mxu0 %v932
        %1253 = vmatpush1.bf16.msra.mxu0 %v931
        %1254 = vmatprep.subr.bf16.mxu0 %v928
        %1255 = vmatpush1.bf16.msra.mxu0 %v927
        %1256 = vmatprep.subr.bf16.mxu0 %v988
        %1257 = vmatpush2.bf16.msra.mxu0 %v987
        %1258 = vmatprep.subr.bf16.mxu0 %v984
        %1259 = vmatpush2.bf16.msra.mxu0 %v983
        %1260 = vmatprep.subr.bf16.mxu0 %v980
        %1261 = vmatpush2.bf16.msra.mxu0 %v979
        %1262 = vmatprep.subr.bf16.mxu0 %v976
        %1263 = vmatpush2.bf16.msra.mxu0 %v975
        %1264 = vmatprep.subr.bf16.mxu0 %v972
        %1265 = vmatpush2.bf16.msra.mxu0 %v971
        %1266 = vmatprep.subr.bf16.mxu0 %v968
        %1267 = vmatpush2.bf16.msra.mxu0 %v967
        %1268 = vmatprep.subr.bf16.mxu0 %v964
        %1269 = vmatpush2.bf16.msra.mxu0 %v963
        %1270 = vmatprep.subr.bf16.mxu0 %v960
        %1271 = vmatpush2.bf16.msra.mxu0 %v959
        %1272 = vmatprep.mubr.bf16.mxu0 %v472
        %1273 = vmatmul.mubr.bf16.gmra.mxu0 %v471
        %v1274 = vpop.f32.mrf.mxu0
        %v1275 = vadd.f32 %v1234, %v1274
        %v1276 = vpop.f32.mrf.mxu0
        %v1277 = vadd.f32 %v1236, %v1276
        %v1278 = vpop.f32.mrf.mxu0
        %v1279 = vpop.f32.mrf.mxu0
        %1280 = vdwg.mxu0
        %v1281 = vadd.f32 %v329, %v1193
        %v1282 = vadd.f32 %v330, %v1195
        %v1283 = vadd.f32 %v331, %v1275
        %v1284 = vadd.f32 %v332, %v1277
        %1285 = vst [vmem:[#allocation2] sm:$0xff] %v1281
        %1286 = vst [vmem:[#allocation2 + $0x8] sm:$0xff] %v1282
        %1287 = vst [vmem:[#allocation2 + $0x10] sm:$0xff] %v1283
        %1288 = vst [vmem:[#allocation2 + $0x18] sm:$0xff] %v1284
        %p1289 = scmp.eq.s32.totalorder %s29, 1
        // Predicated region
        $region61: #{tpu_custom_call.1} parent=39 // pred_check
          %p1290 = pneg %p1289
        $region62: #{tpu_custom_call.1} parent=39 // pred_check_branch
          %1292 = sbr.rel (%p1290) target = $region64
        $region63: #{tpu_custom_call.1} parent=39 // pred_region
          %v1293 = vld [vmem:[#allocation2] sm:$0xff]
          %v1294 = vld [vmem:[#allocation2 + $0x8] sm:$0xff]
          %v1295 = vld [vmem:[#allocation2 + $0x10] sm:$0xff]
          %v1296 = vld [vmem:[#allocation2 + $0x18] sm:$0xff]
          %v1297 = vld [vmem:[#allocation8] sm:$0xf]
          %v1299 = vlaneseq
          %v1300 = vshrl.u32 %v1299, 7
          %v1301 = vsub.s32 0, %v1300
          %v1302 = vrot.slane %v1297, %v1301
          %v1303 = vlaneseq
          %v1304 = vshrl.u32 %v1303, 7
          %v1305 = vsub.s32 1, %v1304
          %v1306 = vrot.slane %v1297, %v1305
          %v1307 = vlaneseq
          %v1308 = vshrl.u32 %v1307, 7
          %v1309 = vsub.s32 2, %v1308
          %v1310 = vrot.slane %v1297, %v1309
          %v1311 = vlaneseq
          %v1312 = vshrl.u32 %v1311, 7
          %v1313 = vsub.s32 3, %v1312
          %v1314 = vrot.slane %v1297, %v1313
          %v1319 = vadd.f32 %v1293, %v1302
          %v1320 = vadd.f32 %v1294, %v1306
          %v1321 = vadd.f32 %v1295, %v1310
          %v1322 = vadd.f32 %v1296, %v1314
          %v1323 = vmax.f32 %v1319, 0.0
          %v1324 = vmax.f32 %v1320, 0.0
          %v1325 = vmax.f32 %v1321, 0.0
          %v1326 = vmax.f32 %v1322, 0.0
          %v1327 = vpack.c.bf16 %v1323, %v1323
          %v1328 = vpack.c.bf16 %v1324, %v1324
          %v1329 = vpack.c.bf16 %v1325, %v1325
          %v1330 = vpack.c.bf16 %v1326, %v1326
          %v1331 = vld [vmem:[#allocation9] sm:$0xf]
          %v1332 = vld [vmem:[#allocation9 + $0x4] sm:$0xf]
          %v1333 = vld [vmem:[#allocation9 + $0x8] sm:$0xf]
          %v1334 = vld [vmem:[#allocation9 + $0xc] sm:$0xf]
          %v1335 = vld [vmem:[#allocation9 + $0x10] sm:$0xf]
          %v1336 = vld [vmem:[#allocation9 + $0x14] sm:$0xf]
          %v1337 = vld [vmem:[#allocation9 + $0x18] sm:$0xf]
          %v1338 = vld [vmem:[#allocation9 + $0x1c] sm:$0xf]
          %v1339 = vld [vmem:[#allocation9 + $0x20] sm:$0xf]
          %v1340 = vld [vmem:[#allocation9 + $0x24] sm:$0xf]
          %v1341 = vld [vmem:[#allocation9 + $0x28] sm:$0xf]
          %v1342 = vld [vmem:[#allocation9 + $0x2c] sm:$0xf]
          %v1343 = vld [vmem:[#allocation9 + $0x30] sm:$0xf]
          %v1344 = vld [vmem:[#allocation9 + $0x34] sm:$0xf]
          %v1345 = vld [vmem:[#allocation9 + $0x38] sm:$0xf]
          %v1346 = vld [vmem:[#allocation9 + $0x3c] sm:$0xf]
          %v1347 = vld [vmem:[#allocation9 + $0x40] sm:$0xf]
          %v1348 = vld [vmem:[#allocation9 + $0x44] sm:$0xf]
          %v1349 = vld [vmem:[#allocation9 + $0x48] sm:$0xf]
          %v1350 = vld [vmem:[#allocation9 + $0x4c] sm:$0xf]
          %v1351 = vld [vmem:[#allocation9 + $0x50] sm:$0xf]
          %v1352 = vld [vmem:[#allocation9 + $0x54] sm:$0xf]
          %v1353 = vld [vmem:[#allocation9 + $0x58] sm:$0xf]
          %v1354 = vld [vmem:[#allocation9 + $0x5c] sm:$0xf]
          %v1355 = vld [vmem:[#allocation9 + $0x60] sm:$0xf]
          %v1356 = vld [vmem:[#allocation9 + $0x64] sm:$0xf]
          %v1357 = vld [vmem:[#allocation9 + $0x68] sm:$0xf]
          %v1358 = vld [vmem:[#allocation9 + $0x6c] sm:$0xf]
          %v1359 = vld [vmem:[#allocation9 + $0x70] sm:$0xf]
          %v1360 = vld [vmem:[#allocation9 + $0x74] sm:$0xf]
          %v1361 = vld [vmem:[#allocation9 + $0x78] sm:$0xf]
          %v1362 = vld [vmem:[#allocation9 + $0x7c] sm:$0xf]
          %v1363 = vld [vmem:[#allocation9 + $0x80] sm:$0xf]
          %v1364 = vld [vmem:[#allocation9 + $0x84] sm:$0xf]
          %v1365 = vld [vmem:[#allocation9 + $0x88] sm:$0xf]
          %v1366 = vld [vmem:[#allocation9 + $0x8c] sm:$0xf]
          %v1367 = vld [vmem:[#allocation9 + $0x90] sm:$0xf]
          %v1368 = vld [vmem:[#allocation9 + $0x94] sm:$0xf]
          %v1369 = vld [vmem:[#allocation9 + $0x98] sm:$0xf]
          %v1370 = vld [vmem:[#allocation9 + $0x9c] sm:$0xf]
          %v1371 = vld [vmem:[#allocation9 + $0xa0] sm:$0xf]
          %v1372 = vld [vmem:[#allocation9 + $0xa4] sm:$0xf]
          %v1373 = vld [vmem:[#allocation9 + $0xa8] sm:$0xf]
          %v1374 = vld [vmem:[#allocation9 + $0xac] sm:$0xf]
          %v1375 = vld [vmem:[#allocation9 + $0xb0] sm:$0xf]
          %v1376 = vld [vmem:[#allocation9 + $0xb4] sm:$0xf]
          %v1377 = vld [vmem:[#allocation9 + $0xb8] sm:$0xf]
          %v1378 = vld [vmem:[#allocation9 + $0xbc] sm:$0xf]
          %v1379 = vld [vmem:[#allocation9 + $0xc0] sm:$0xf]
          %v1380 = vld [vmem:[#allocation9 + $0xc4] sm:$0xf]
          %v1381 = vld [vmem:[#allocation9 + $0xc8] sm:$0xf]
          %v1382 = vld [vmem:[#allocation9 + $0xcc] sm:$0xf]
          %v1383 = vld [vmem:[#allocation9 + $0xd0] sm:$0xf]
          %v1384 = vld [vmem:[#allocation9 + $0xd4] sm:$0xf]
          %v1385 = vld [vmem:[#allocation9 + $0xd8] sm:$0xf]
          %v1386 = vld [vmem:[#allocation9 + $0xdc] sm:$0xf]
          %v1387 = vld [vmem:[#allocation9 + $0xe0] sm:$0xf]
          %v1388 = vld [vmem:[#allocation9 + $0xe4] sm:$0xf]
          %v1389 = vld [vmem:[#allocation9 + $0xe8] sm:$0xf]
          %v1390 = vld [vmem:[#allocation9 + $0xec] sm:$0xf]
          %v1391 = vld [vmem:[#allocation9 + $0xf0] sm:$0xf]
          %v1392 = vld [vmem:[#allocation9 + $0xf4] sm:$0xf]
          %v1393 = vld [vmem:[#allocation9 + $0xf8] sm:$0xf]
          %v1394 = vld [vmem:[#allocation9 + $0xfc] sm:$0xf]
          %v1395 = vld [vmem:[%s4] sm:$0x1]
          %v1397 = vlaneseq
          %v1398 = vshrl.u32 %v1397, 7
          %v1399 = vsub.s32 0, %v1398
          %v1400 = vrot.slane %v1395, %v1399
          %v1466 = vunpack.c.l.b16 %v1331
          %v1467 = vunpack.c.l.b16 %v1332
          %v1468 = vunpack.c.l.b16 %v1333
          %v1469 = vunpack.c.l.b16 %v1334
          %v1470 = vunpack.c.l.b16 %v1335
          %v1471 = vunpack.c.l.b16 %v1336
          %v1472 = vunpack.c.l.b16 %v1337
          %v1473 = vunpack.c.l.b16 %v1338
          %v1474 = vunpack.c.l.b16 %v1339
          %v1475 = vunpack.c.l.b16 %v1340
          %v1476 = vunpack.c.l.b16 %v1341
          %v1477 = vunpack.c.l.b16 %v1342
          %v1478 = vunpack.c.l.b16 %v1343
          %v1479 = vunpack.c.l.b16 %v1344
          %v1480 = vunpack.c.l.b16 %v1345
          %v1481 = vunpack.c.l.b16 %v1346
          %v1482 = vunpack.c.l.b16 %v1347
          %v1483 = vunpack.c.l.b16 %v1348
          %v1484 = vunpack.c.l.b16 %v1349
          %v1485 = vunpack.c.l.b16 %v1350
          %v1486 = vunpack.c.l.b16 %v1351
          %v1487 = vunpack.c.l.b16 %v1352
          %v1488 = vunpack.c.l.b16 %v1353
          %v1489 = vunpack.c.l.b16 %v1354
          %v1490 = vunpack.c.l.b16 %v1355
          %v1491 = vunpack.c.l.b16 %v1356
          %v1492 = vunpack.c.l.b16 %v1357
          %v1493 = vunpack.c.l.b16 %v1358
          %v1494 = vunpack.c.l.b16 %v1359
          %v1495 = vunpack.c.l.b16 %v1360
          %v1496 = vunpack.c.l.b16 %v1361
          %v1497 = vunpack.c.l.b16 %v1362
          %v1498 = vunpack.c.l.b16 %v1363
          %v1499 = vunpack.c.l.b16 %v1364
          %v1500 = vunpack.c.l.b16 %v1365
          %v1501 = vunpack.c.l.b16 %v1366
          %v1502 = vunpack.c.l.b16 %v1367
          %v1503 = vunpack.c.l.b16 %v1368
          %v1504 = vunpack.c.l.b16 %v1369
          %v1505 = vunpack.c.l.b16 %v1370
          %v1506 = vunpack.c.l.b16 %v1371
          %v1507 = vunpack.c.l.b16 %v1372
          %v1508 = vunpack.c.l.b16 %v1373
          %v1509 = vunpack.c.l.b16 %v1374
          %v1510 = vunpack.c.l.b16 %v1375
          %v1511 = vunpack.c.l.b16 %v1376
          %v1512 = vunpack.c.l.b16 %v1377
          %v1513 = vunpack.c.l.b16 %v1378
          %v1514 = vunpack.c.l.b16 %v1379
          %v1515 = vunpack.c.l.b16 %v1380
          %v1516 = vunpack.c.l.b16 %v1381
          %v1517 = vunpack.c.l.b16 %v1382
          %v1518 = vunpack.c.l.b16 %v1383
          %v1519 = vunpack.c.l.b16 %v1384
          %v1520 = vunpack.c.l.b16 %v1385
          %v1521 = vunpack.c.l.b16 %v1386
          %v1522 = vunpack.c.l.b16 %v1387
          %v1523 = vunpack.c.l.b16 %v1388
          %v1524 = vunpack.c.l.b16 %v1389
          %v1525 = vunpack.c.l.b16 %v1390
          %v1526 = vunpack.c.l.b16 %v1391
          %v1527 = vunpack.c.l.b16 %v1392
          %v1528 = vunpack.c.l.b16 %v1393
          %v1529 = vunpack.c.l.b16 %v1394
          %v1530 = vpack.c.b16 %v1467, %v1466
          %v1531 = vpack.c.b16 %v1469, %v1468
          %v1532 = vpack.c.b16 %v1471, %v1470
          %v1533 = vpack.c.b16 %v1473, %v1472
          %v1534 = vpack.c.b16 %v1475, %v1474
          %v1535 = vpack.c.b16 %v1477, %v1476
          %v1536 = vpack.c.b16 %v1479, %v1478
          %v1537 = vpack.c.b16 %v1481, %v1480
          %v1538 = vpack.c.b16 %v1483, %v1482
          %v1539 = vpack.c.b16 %v1485, %v1484
          %v1540 = vpack.c.b16 %v1487, %v1486
          %v1541 = vpack.c.b16 %v1489, %v1488
          %v1542 = vpack.c.b16 %v1491, %v1490
          %v1543 = vpack.c.b16 %v1493, %v1492
          %v1544 = vpack.c.b16 %v1495, %v1494
          %v1545 = vpack.c.b16 %v1497, %v1496
          %v1546 = vpack.c.b16 %v1499, %v1498
          %v1547 = vpack.c.b16 %v1501, %v1500
          %v1548 = vpack.c.b16 %v1503, %v1502
          %v1549 = vpack.c.b16 %v1505, %v1504
          %v1550 = vpack.c.b16 %v1507, %v1506
          %v1551 = vpack.c.b16 %v1509, %v1508
          %v1552 = vpack.c.b16 %v1511, %v1510
          %v1553 = vpack.c.b16 %v1513, %v1512
          %v1554 = vpack.c.b16 %v1515, %v1514
          %v1555 = vpack.c.b16 %v1517, %v1516
          %v1556 = vpack.c.b16 %v1519, %v1518
          %v1557 = vpack.c.b16 %v1521, %v1520
          %v1558 = vpack.c.b16 %v1523, %v1522
          %v1559 = vpack.c.b16 %v1525, %v1524
          %v1560 = vpack.c.b16 %v1527, %v1526
          %v1561 = vpack.c.b16 %v1529, %v1528
          %1594 = vmatprep.subr.bf16.mxu0 0
          %1595 = vmatpush1.bf16.msra.mxu0 %v1537
          %1596 = vmatprep.subr.bf16.mxu0 0
          %1597 = vmatpush1.bf16.msra.mxu0 %v1536
          %1598 = vmatprep.subr.bf16.mxu0 0
          %1599 = vmatpush1.bf16.msra.mxu0 %v1535
          %1600 = vmatprep.subr.bf16.mxu0 0
          %1601 = vmatpush1.bf16.msra.mxu0 %v1534
          %1602 = vmatprep.subr.bf16.mxu0 0
          %1603 = vmatpush1.bf16.msra.mxu0 %v1533
          %1604 = vmatprep.subr.bf16.mxu0 0
          %1605 = vmatpush1.bf16.msra.mxu0 %v1532
          %1606 = vmatprep.subr.bf16.mxu0 0
          %1607 = vmatpush1.bf16.msra.mxu0 %v1531
          %1608 = vmatprep.subr.bf16.mxu0 0
          %1609 = vmatpush1.bf16.msra.mxu0 %v1530
          %1610 = vmatprep.subr.bf16.mxu0 0
          %1611 = vmatpush2.bf16.msra.mxu0 %v1545
          %1612 = vmatprep.subr.bf16.mxu0 0
          %1613 = vmatpush2.bf16.msra.mxu0 %v1544
          %1614 = vmatprep.subr.bf16.mxu0 0
          %1615 = vmatpush2.bf16.msra.mxu0 %v1543
          %1616 = vmatprep.subr.bf16.mxu0 0
          %1617 = vmatpush2.bf16.msra.mxu0 %v1542
          %1618 = vmatprep.subr.bf16.mxu0 0
          %1619 = vmatpush2.bf16.msra.mxu0 %v1541
          %1620 = vmatprep.subr.bf16.mxu0 0
          %1621 = vmatpush2.bf16.msra.mxu0 %v1540
          %1622 = vmatprep.subr.bf16.mxu0 0
          %1623 = vmatpush2.bf16.msra.mxu0 %v1539
          %1624 = vmatprep.subr.bf16.mxu0 0
          %1625 = vmatpush2.bf16.msra.mxu0 %v1538
          %1626 = vmatprep.mubr.bf16.mxu0 %v1328
          %1627 = vmatmul.mubr.bf16.gmra.mxu0 %v1327
          %v1628 = vpop.f32.mrf.mxu0
          %v1629 = vadd.f32 %v1400, %v1628
          %v1630 = vpop.f32.mrf.mxu0
          %v1631 = vpop.f32.mrf.mxu0
          %v1632 = vpop.f32.mrf.mxu0
          %1633 = vdwg.mxu0
          %1634 = vmatprep.subr.bf16.mxu0 0
          %1635 = vmatpush1.bf16.msra.mxu0 %v1553
          %1636 = vmatprep.subr.bf16.mxu0 0
          %1637 = vmatpush1.bf16.msra.mxu0 %v1552
          %1638 = vmatprep.subr.bf16.mxu0 0
          %1639 = vmatpush1.bf16.msra.mxu0 %v1551
          %1640 = vmatprep.subr.bf16.mxu0 0
          %1641 = vmatpush1.bf16.msra.mxu0 %v1550
          %1642 = vmatprep.subr.bf16.mxu0 0
          %1643 = vmatpush1.bf16.msra.mxu0 %v1549
          %1644 = vmatprep.subr.bf16.mxu0 0
          %1645 = vmatpush1.bf16.msra.mxu0 %v1548
          %1646 = vmatprep.subr.bf16.mxu0 0
          %1647 = vmatpush1.bf16.msra.mxu0 %v1547
          %1648 = vmatprep.subr.bf16.mxu0 0
          %1649 = vmatpush1.bf16.msra.mxu0 %v1546
          %1650 = vmatprep.subr.bf16.mxu0 0
          %1651 = vmatpush2.bf16.msra.mxu0 %v1561
          %1652 = vmatprep.subr.bf16.mxu0 0
          %1653 = vmatpush2.bf16.msra.mxu0 %v1560
          %1654 = vmatprep.subr.bf16.mxu0 0
          %1655 = vmatpush2.bf16.msra.mxu0 %v1559
          %1656 = vmatprep.subr.bf16.mxu0 0
          %1657 = vmatpush2.bf16.msra.mxu0 %v1558
          %1658 = vmatprep.subr.bf16.mxu0 0
          %1659 = vmatpush2.bf16.msra.mxu0 %v1557
          %1660 = vmatprep.subr.bf16.mxu0 0
          %1661 = vmatpush2.bf16.msra.mxu0 %v1556
          %1662 = vmatprep.subr.bf16.mxu0 0
          %1663 = vmatpush2.bf16.msra.mxu0 %v1555
          %1664 = vmatprep.subr.bf16.mxu0 0
          %1665 = vmatpush2.bf16.msra.mxu0 %v1554
          %1666 = vmatprep.mubr.bf16.mxu0 %v1330
          %1667 = vmatmul.mubr.bf16.gmra.mxu0 %v1329
          %v1668 = vpop.f32.mrf.mxu0
          %v1669 = vadd.f32 %v1629, %v1668
          %v1670 = vpop.f32.mrf.mxu0
          %v1671 = vpop.f32.mrf.mxu0
          %v1672 = vpop.f32.mrf.mxu0
          %1673 = vdwg.mxu0
          %v1674 = vlaneseq
          %v1675 = vand.u32 %v1674, 127
          %vm1676 = vcmp.ge.s32.totalorder %v1675, 3
          %v1677 = vmul.f32 %v1669, %v1669
          %v1678 = vsel %vm1676, %v1677, 0.0
          %1679 = vadd.xlane.f32.xlu0 %v1678
          %v1680 = vpop.xlane.xlu0 %1679
          %v1681 = vmax.f32 %v1680, 1e-24
          %v1682 = vrsqrt.pop %v1681
          %v1683 = vmul.f32 %v1669, %v1682
          %v1684 = vsel %vm1676, %v1683, %v1669
          %1685 = vst [vmem:[#allocation11] sm:$0xff] %v1684
        $region64: #{tpu_custom_call.1} parent=39 // pred_fallthru
          _
        // Predicated region
        $region65: #{tpu_custom_call.1} parent=39 // pred_check
          %p1686 = pneg %p171
        $region66: #{tpu_custom_call.1} parent=39 // pred_check_branch
          %1688 = sbr.rel (%p1686) target = $region68
        $region67: #{tpu_custom_call.1} parent=39 // pred_region
          %s1690 = ssub.s32 128, 128
          %1691 = vsyncadd [#allocation5], %s1690
          %s1692 = smul.addr %s28, 128
          %s1693 = scalar_lea.hbm %s5, %s1692
          %s1695 = sshll.u32 [#allocation11], 4
          %s1696 = int_to_ptr.vmem [resolvable:$true] %s1695
          %1698 = dma.vmem_to_hbm [thread:$0]  %s1696, 128, %s1693, [#allocation5]
        $region68: #{tpu_custom_call.1} parent=39 // pred_fallthru
          _
        // Predicated region
        $region69: #{tpu_custom_call.1} parent=39 // pred_check
          %p1699 = pneg %p171
        $region70: #{tpu_custom_call.1} parent=39 // pred_check_branch
          %1701 = sbr.rel (%p1699) target = $region72
        $region71: #{tpu_custom_call.1} parent=39 // pred_region
          %1702 = dma.done [#allocation5], 128
        $region72: #{tpu_custom_call.1} parent=39 // pred_fallthru
          _
      $region40: #{tpu_custom_call.1} parent=5 // pred_fallthru
        _
      %p1703 = scmp.le.s32.totalorder 2, %s19
      // Predicated region
      $region73: #{tpu_custom_call.1} parent=5 // pred_check
        %p1704 = pneg %p1703
      $region74: #{tpu_custom_call.1} parent=5 // pred_check_branch
        %1706 = sbr.rel (%p1704) target = $region76
      $region75: #{tpu_custom_call.1} parent=5 // pred_region
        %s1707 = ssub.s32 %s19, 2
      $region76: #{tpu_custom_call.1} parent=5 // pred_fallthru
        _
    $region6: #{tpu_custom_call.1} parent=1 // loop_footer
      %s23 = sadd.s32 1, %s19
    $region7: #{tpu_custom_call.1} parent=1 // loop_footer_branch
      %18 = sbr.rel target = $region3
    $region8: #{tpu_custom_call.1} parent=1 // loop_exit
      _
    %1708 = vsyncpa [#allocation4], 1
    %s1709 = scalar_lea.sflag [#allocation4], 1
    %1710 = vsyncpa %s1709, 1
    %1711 = vsyncpa [#allocation7], 1
    %s1712 = scalar_lea.sflag [#allocation7], 1
    %1713 = vsyncpa %s1712, 1
    %1714 = vsyncpa [#allocation10], 1
    %1715 = vsyncpa [#allocation5], 1
    %s1716 = scalar_lea.sflag [#allocation5], 1
    %1717 = vsyncpa %s1716, 1

</llo_original>
